<compile_context>
chip_gen: v6e
topology: v6e:2x2x1
jax: 0.10.0
libtpu: 0.0.40
codegen_flags: <defaults>
</compile_context>

<pallas_src>
import functools

import jax
import jax.numpy as jnp
from jax.experimental import pallas as pl
from jax.experimental.pallas import tpu as pltpu


def critic_kernel(x_ref, w1_ref, b1_ref, m1f_ref, m1l_ref,
                  w2_ref, b2_ref, m2f_ref, m2l_ref,
                  wo_ref, sel_ref, bo_ref,
                  o_ref,
                  a1s_ref, h1s_ref, a2s_ref, h2s_ref,
                  *, apply_sigmoid):
    """Processes BB batch elements per grid step.

    x_ref  : (BB*L, C)    bf16 input rows, row index = b*L + l
    w1_ref : (C, 3*C1)    packed conv1 taps [tap0 | tap1 | tap2]
    w2_ref : (C1, 3*C2)   packed conv2 taps
    m*_ref : (rows, 1)    0/1 masks killing cross-batch / padding tap rows
    wo_ref : (BB*Lq, C2)  out.weight rearranged + tiled per batch element
    sel_ref: (BB, BB*Lq)  block-diagonal ones -> per-batch row-group sums
    o_ref  : (BB, 1)      logits (sigmoid applied unless wgan)
    a*s/h*s: VMEM staging for tap shifts and even/odd max-pool reads
    """
    R1 = x_ref.shape[0]            # BB * L
    C1 = b1_ref.shape[1]
    C2 = b2_ref.shape[1]
    R2 = R1 // 2                   # BB * L/2
    R3 = R1 // 4                   # BB * L/4
    f32 = jnp.float32

    def conv_block(a, a_s, m_first, m_last, bias, cout, rows):
        # a: (rows, 3*cout) dense per-tap outputs; combine with +/-1 row shifts.
        a_s[pl.ds(0, 1), :] = jnp.zeros((1, 3 * cout), f32)          # top halo
        a_s[pl.ds(rows + 1, 1), :] = jnp.zeros((1, 3 * cout), f32)   # bottom halo
        a_s[pl.ds(1, rows), :] = a
        prev = a_s[pl.ds(0, rows), pl.ds(0, cout)]         # tap0 from row r-1
        mid = a_s[pl.ds(1, rows), pl.ds(cout, cout)]       # tap1 from row r
        nxt = a_s[pl.ds(2, rows), pl.ds(2 * cout, cout)]   # tap2 from row r+1
        y = mid + m_first * prev + m_last * nxt + bias
        return jnp.where(y > 0, y, 0.2 * y)                # LeakyReLU(0.2)

    # ---- conv1: one MXU push over all BB*L rows, then LeakyReLU ----------
    a1 = jnp.dot(x_ref[...], w1_ref[...], preferred_element_type=f32)   # (R1, 3*C1)
    h1 = conv_block(a1, a1s_ref, m1f_ref[...], m1l_ref[...], b1_ref[...], C1, R1)

    # ---- MaxPool1d(2): single even/odd row max ----------------------------
    h1s_ref[...] = h1
    p1 = jnp.maximum(h1s_ref[pl.ds(0, R2, 2), :],
                     h1s_ref[pl.ds(1, R2, 2), :])                        # (R2, C1)

    # ---- conv2 + LeakyReLU + MaxPool1d(2) ----------------------------------
    a2 = jnp.dot(p1.astype(w2_ref.dtype), w2_ref[...],
                 preferred_element_type=f32)                             # (R2, 3*C2)
    h2 = conv_block(a2, a2s_ref, m2f_ref[...], m2l_ref[...], b2_ref[...], C2, R2)

    h2s_ref[...] = h2
    p2 = jnp.maximum(h2s_ref[pl.ds(0, R3, 2), :],
                     h2s_ref[pl.ds(1, R3, 2), :])                        # (R3, C2)

    # ---- flatten + Linear(64*L/4 -> 1) (+ sigmoid), all BB logits at once --
    prod = p2 * wo_ref[...]                                       # (BB*Lq, C2)
    z = jnp.dot(sel_ref[...], prod, preferred_element_type=f32)   # (BB, C2)
    logit = jnp.sum(z, axis=1, keepdims=True) + bo_ref[...]       # (BB, 1)
    if apply_sigmoid:
        logit = 1.0 / (1.0 + jnp.exp(-logit))
    o_ref[...] = logit


def critic_forward(x, params, *, wgan=False, block_batch=8):
    """x: (B, L, C) float32 — same layout as the PyTorch `input` tensor."""
    B, L, C = x.shape
    C1 = params["b1"].shape[0]
    C2 = params["b2"].shape[0]
    assert L % 4 == 0, "Critic assumes the sequence length is divisible by 4"
    Lh, Lq = L // 2, L // 4

    BB = block_batch
    assert BB % 8 == 0
    B_pad = ((B + BB - 1) // BB) * BB
    G = B_pad // BB

    # ---- pack torch-layout parameters for the kernel (glue) ---------------
    # conv tap k as a (Cin, Cout) matrix, concatenated along lanes -> (Cin, 3*Cout)
    w1cat = jnp.transpose(params["w1"], (1, 2, 0)).reshape(C, 3 * C1)
    w2cat = jnp.transpose(params["w2"], (1, 2, 0)).reshape(C1, 3 * C2)
    b1 = params["b1"].reshape(1, C1).astype(jnp.float32)
    b2 = params["b2"].reshape(1, C2).astype(jnp.float32)
    bo = params["bo"].reshape(1, 1).astype(jnp.float32)
    # torch flattens (B, 64, Lq) channel-major: flat idx = c*Lq + l.
    wo = params["wo"].reshape(C2, Lq).T                           # (Lq, C2)
    wo_tiled = jnp.tile(wo, (BB, 1)).astype(jnp.float32)          # (BB*Lq, C2)
    sel = jnp.repeat(jnp.eye(BB, dtype=jnp.float32), Lq, axis=1)  # (BB, BB*Lq)

    # 0/1 masks killing the conv tap contributions that would cross a batch
    # element boundary (these also implement the padding=1 zeros).
    l1 = jnp.arange(BB * L) % L
    m1f = (l1 != 0).astype(jnp.float32)[:, None]
    m1l = (l1 != L - 1).astype(jnp.float32)[:, None]
    l2 = jnp.arange(BB * Lh) % Lh
    m2f = (l2 != 0).astype(jnp.float32)[:, None]
    m2l = (l2 != Lh - 1).astype(jnp.float32)[:, None]

    # bf16 matmul inputs (f32 accumulation inside the kernel).
    xb = x.astype(jnp.bfloat16)
    if B_pad != B:
        xb = jnp.concatenate(
            [xb, jnp.zeros((B_pad - B, L, C), jnp.bfloat16)], axis=0)
    x2d = xb.reshape(B_pad * L, C)      # row index = b*L + l (free reshape)

    kernel = functools.partial(critic_kernel, apply_sigmoid=not wgan)
    const = lambda g: (0, 0)

    out = pl.pallas_call(
        kernel,
        out_shape=jax.ShapeDtypeStruct((B_pad, 1), jnp.float32),
        grid_spec=pltpu.PrefetchScalarGridSpec(
            num_scalar_prefetch=0,
            grid=(G,),
            in_specs=[
                pl.BlockSpec((BB * L, C), lambda g: (g, 0)),   # x rows of step g
                pl.BlockSpec((C, 3 * C1), const),              # packed conv1 taps
                pl.BlockSpec((1, C1), const),
                pl.BlockSpec((BB * L, 1), const),              # m1 first / last
                pl.BlockSpec((BB * L, 1), const),
                pl.BlockSpec((C1, 3 * C2), const),             # packed conv2 taps
                pl.BlockSpec((1, C2), const),
                pl.BlockSpec((BB * Lh, 1), const),             # m2 first / last
                pl.BlockSpec((BB * Lh, 1), const),
                pl.BlockSpec((BB * Lq, C2), const),            # tiled out.weight
                pl.BlockSpec((BB, BB * Lq), const),            # group selector
                pl.BlockSpec((1, 1), const),                   # out bias
            ],
            out_specs=pl.BlockSpec((BB, 1), lambda g: (g, 0)),
            scratch_shapes=[
                pltpu.VMEM((BB * L + 2, 3 * C1), jnp.float32),   # conv1 tap staging
                pltpu.VMEM((BB * L, C1), jnp.float32),           # conv1 act (pool)
                pltpu.VMEM((BB * Lh + 2, 3 * C2), jnp.float32),  # conv2 tap staging
                pltpu.VMEM((BB * Lh, C2), jnp.float32),          # conv2 act (pool)
            ],
        ),
        compiler_params=pltpu.CompilerParams(
            dimension_semantics=("parallel",)),
    )(x2d, w1cat.astype(jnp.bfloat16), b1, m1f, m1l,
      w2cat.astype(jnp.bfloat16), b2, m2f, m2l, wo_tiled, sel, bo)
    return out[:B]


def critic_reference(x, params, *, wgan=False):
    """Pure-JAX float32 reference of the PyTorch forward pass (for validation)."""
    def conv_lrelu_pool(h, w, b):                      # h: (B, L, Cin)
        L = h.shape[1]
        hp = jnp.pad(h, ((0, 0), (1, 1), (0, 0)))
        taps = jnp.transpose(w, (2, 1, 0))             # (3, Cin, Cout)
        y = sum(jnp.einsum("blc,co->blo", hp[:, k:k + L], taps[k]) for k in range(3))
        y = y + b
        y = jnp.where(y > 0, y, 0.2 * y)
        B, L, Co = y.shape
        return jnp.max(y.reshape(B, L // 2, 2, Co), axis=2)

    h = conv_lrelu_pool(x, params["w1"], params["b1"])
    h = conv_lrelu_pool(h, params["w2"], params["b2"])
    flat = jnp.transpose(h, (0, 2, 1)).reshape(x.shape[0], -1)   # channel-major flatten
    logit = flat @ params["wo"].T + params["bo"]
    return logit if wgan else jax.nn.sigmoid(logit)


if __name__ == "__main__":
    B, L, C = 16, 16, 4          # input_shape = (L, C) = (16, 4)
    C1, C2, Lq = 32, 64, L // 4

    key = jax.random.PRNGKey(0)
    k1, k2, k3, k4, k5, k6, kx = jax.random.split(key, 7)
    params = {
        "w1": 0.1 * jax.random.normal(k1, (C1, C, 3), jnp.float32),   # conv1.weight
        "b1": 0.1 * jax.random.normal(k2, (C1,), jnp.float32),
        "w2": 0.1 * jax.random.normal(k3, (C2, C1, 3), jnp.float32),  # conv2.weight
        "b2": 0.1 * jax.random.normal(k4, (C2,), jnp.float32),
        "wo": 0.1 * jax.random.normal(k5, (1, C2 * Lq), jnp.float32), # out.weight
        "bo": 0.1 * jax.random.normal(k6, (1,), jnp.float32),
    }
    x = jax.random.normal(kx, (B, L, C), jnp.float32)

    out = critic_forward(x, params, wgan=False)
    out = jax.block_until_ready(out)

    ref = critic_reference(x, params, wgan=False)
    assert out.shape == (B, 1), out.shape
    # bf16 matmul inputs (f32 accumulation) -> slightly looser tolerance vs f32 ref.
    assert jnp.allclose(out, ref, rtol=2e-2, atol=2e-2), (out, ref)

    print("KERNEL_OK")
</pallas_src>

<mosaic_0001>
module attributes {stable_mosaic.version = 11 : i64} {
  func.func @critic_kernel(%arg0: i32, %arg1: memref<128x4xbf16, #tpu.memory_space<vmem>>, %arg2: memref<4x96xbf16, #tpu.memory_space<vmem>>, %arg3: memref<1x32xf32, #tpu.memory_space<vmem>>, %arg4: memref<128x1xf32, #tpu.memory_space<vmem>>, %arg5: memref<128x1xf32, #tpu.memory_space<vmem>>, %arg6: memref<32x192xbf16, #tpu.memory_space<vmem>>, %arg7: memref<1x64xf32, #tpu.memory_space<vmem>>, %arg8: memref<64x1xf32, #tpu.memory_space<vmem>>, %arg9: memref<64x1xf32, #tpu.memory_space<vmem>>, %arg10: memref<32x64xf32, #tpu.memory_space<vmem>>, %arg11: memref<8x32xf32, #tpu.memory_space<vmem>>, %arg12: memref<1x1xf32, #tpu.memory_space<vmem>>, %arg13: memref<8x1xf32, #tpu.memory_space<vmem>>, %arg14: memref<130x96xf32, #tpu.memory_space<vmem>>, %arg15: memref<128x32xf32, #tpu.memory_space<vmem>>, %arg16: memref<66x192xf32, #tpu.memory_space<vmem>>, %arg17: memref<64x64xf32, #tpu.memory_space<vmem>>) attributes {dimension_semantics = [#tpu.dimension_semantics<parallel>], iteration_bounds = array<i64: 2>, scalar_prefetch = 0 : i64, scratch_operands = 4 : i64, tpu.core_type = #tpu.core_type<tc>, window_params = [{transform_indices = @transform_0, window_bounds = array<i64: 128, 4>}, {pipeline_mode = #tpu.pipeline_mode<synchronous>, transform_indices = @transform_1, window_bounds = array<i64: 4, 96>}, {pipeline_mode = #tpu.pipeline_mode<synchronous>, transform_indices = @transform_2, window_bounds = array<i64: 1, 32>}, {pipeline_mode = #tpu.pipeline_mode<synchronous>, transform_indices = @transform_3, window_bounds = array<i64: 128, 1>}, {pipeline_mode = #tpu.pipeline_mode<synchronous>, transform_indices = @transform_4, window_bounds = array<i64: 128, 1>}, {pipeline_mode = #tpu.pipeline_mode<synchronous>, transform_indices = @transform_5, window_bounds = array<i64: 32, 192>}, {pipeline_mode = #tpu.pipeline_mode<synchronous>, transform_indices = @transform_6, window_bounds = array<i64: 1, 64>}, {pipeline_mode = #tpu.pipeline_mode<synchronous>, transform_indices = @transform_7, window_bounds = array<i64: 64, 1>}, {pipeline_mode = #tpu.pipeline_mode<synchronous>, transform_indices = @transform_8, window_bounds = array<i64: 64, 1>}, {pipeline_mode = #tpu.pipeline_mode<synchronous>, transform_indices = @transform_9, window_bounds = array<i64: 32, 64>}, {pipeline_mode = #tpu.pipeline_mode<synchronous>, transform_indices = @transform_10, window_bounds = array<i64: 8, 32>}, {pipeline_mode = #tpu.pipeline_mode<synchronous>, transform_indices = @transform_11, window_bounds = array<i64: 1, 1>}, {transform_indices = @transform_12, window_bounds = array<i64: 8, 1>}]} {
    %c0 = arith.constant 0 : index
    %c0_0 = arith.constant 0 : index
    %0 = vector.load %arg1[%c0, %c0_0] : memref<128x4xbf16, #tpu.memory_space<vmem>>, vector<128x4xbf16>
    %c0_1 = arith.constant 0 : index
    %c0_2 = arith.constant 0 : index
    %1 = vector.load %arg2[%c0_1, %c0_2] : memref<4x96xbf16, #tpu.memory_space<vmem>>, vector<4x96xbf16>
    %cst = arith.constant dense<0.000000e+00> : vector<128x96xf32>
    %2 = tpu.matmul %0, %1, %cst {dimension_numbers = #tpu.dot_dimension_numbers<[1], [0], [0], [1], [0, 0, 1, 1], [], []>} : vector<128x4xbf16>, vector<4x96xbf16>, vector<128x96xf32> -> vector<128x96xf32>
    %c0_3 = arith.constant 0 : index
    %c0_4 = arith.constant 0 : index
    %3 = vector.load %arg4[%c0_3, %c0_4] : memref<128x1xf32, #tpu.memory_space<vmem>>, vector<128x1xf32>
    %c0_5 = arith.constant 0 : index
    %c0_6 = arith.constant 0 : index
    %4 = vector.load %arg5[%c0_5, %c0_6] : memref<128x1xf32, #tpu.memory_space<vmem>>, vector<128x1xf32>
    %c0_7 = arith.constant 0 : index
    %c0_8 = arith.constant 0 : index
    %5 = vector.load %arg3[%c0_7, %c0_8] : memref<1x32xf32, #tpu.memory_space<vmem>>, vector<1x32xf32>
    %cst_9 = arith.constant 0.000000e+00 : f32
    %6 = vector.broadcast %cst_9 : f32 to vector<1x96xf32>
    %c0_10 = arith.constant 0 : index
    %c0_11 = arith.constant 0 : index
    %7 = vector.load %arg14[%c0_10, %c0_11] : memref<130x96xf32, #tpu.memory_space<vmem>>, vector<1x96xf32>
    tpu.vector_store %arg14[%c0_10, %c0_11], %6 {strides = array<i32>} : memref<130x96xf32, #tpu.memory_space<vmem>>, vector<1x96xf32>,
    %cst_12 = arith.constant 0.000000e+00 : f32
    %8 = vector.broadcast %cst_12 : f32 to vector<1x96xf32>
    %c129 = arith.constant 129 : index
    %c0_13 = arith.constant 0 : index
    %9 = vector.load %arg14[%c129, %c0_13] : memref<130x96xf32, #tpu.memory_space<vmem>>, vector<1x96xf32>
    tpu.vector_store %arg14[%c129, %c0_13], %8 {strides = array<i32>} : memref<130x96xf32, #tpu.memory_space<vmem>>, vector<1x96xf32>,
    %c1 = arith.constant 1 : index
    %c0_14 = arith.constant 0 : index
    %10 = vector.load %arg14[%c1, %c0_14] : memref<130x96xf32, #tpu.memory_space<vmem>>, vector<128x96xf32>
    tpu.vector_store %arg14[%c1, %c0_14], %2 {strides = array<i32>} : memref<130x96xf32, #tpu.memory_space<vmem>>, vector<128x96xf32>,
    %c0_15 = arith.constant 0 : index
    %c0_16 = arith.constant 0 : index
    %11 = vector.load %arg14[%c0_15, %c0_16] : memref<130x96xf32, #tpu.memory_space<vmem>>, vector<128x32xf32>
    %c1_17 = arith.constant 1 : index
    %c32 = arith.constant 32 : index
    %12 = vector.load %arg14[%c1_17, %c32] : memref<130x96xf32, #tpu.memory_space<vmem>>, vector<128x32xf32>
    %c2 = arith.constant 2 : index
    %c64 = arith.constant 64 : index
    %13 = vector.load %arg14[%c2, %c64] : memref<130x96xf32, #tpu.memory_space<vmem>>, vector<128x32xf32>
    %14 = vector.broadcast %3 : vector<128x1xf32> to vector<128x32xf32>
    %15 = arith.mulf %14, %11 : vector<128x32xf32>
    %16 = arith.addf %12, %15 : vector<128x32xf32>
    %17 = vector.broadcast %4 : vector<128x1xf32> to vector<128x32xf32>
    %18 = arith.mulf %17, %13 : vector<128x32xf32>
    %19 = arith.addf %16, %18 : vector<128x32xf32>
    %20 = vector.broadcast %5 : vector<1x32xf32> to vector<128x32xf32>
    %21 = arith.addf %19, %20 : vector<128x32xf32>
    %cst_18 = arith.constant 0.000000e+00 : f32
    %22 = vector.broadcast %cst_18 : f32 to vector<128x32xf32>
    %23 = arith.cmpf ogt, %21, %22 : vector<128x32xf32>
    %cst_19 = arith.constant 2.000000e-01 : f32
    %24 = vector.broadcast %cst_19 : f32 to vector<128x32xf32>
    %25 = arith.mulf %24, %21 : vector<128x32xf32>
    %26 = arith.select %23, %21, %25 : vector<128x32xi1>, vector<128x32xf32>
    %c0_20 = arith.constant 0 : index
    %c0_21 = arith.constant 0 : index
    %27 = vector.load %arg15[%c0_20, %c0_21] : memref<128x32xf32, #tpu.memory_space<vmem>>, vector<128x32xf32>
    tpu.vector_store %arg15[%c0_20, %c0_21], %26 {strides = array<i32>} : memref<128x32xf32, #tpu.memory_space<vmem>>, vector<128x32xf32>,
    %c0_22 = arith.constant 0 : index
    %c0_23 = arith.constant 0 : index
    %28 = tpu.strided_load %arg15[%c0_22, %c0_23] {strides = array<i32: 2, 1>} : memref<128x32xf32, #tpu.memory_space<vmem>>, vector<64x32xf32>
    %c1_24 = arith.constant 1 : index
    %c0_25 = arith.constant 0 : index
    %29 = tpu.strided_load %arg15[%c1_24, %c0_25] {strides = array<i32: 2, 1>} : memref<128x32xf32, #tpu.memory_space<vmem>>, vector<64x32xf32>
    %30 = arith.maximumf %28, %29 : vector<64x32xf32>
    %31 = arith.truncf %30 : vector<64x32xf32> to vector<64x32xbf16>
    %c0_26 = arith.constant 0 : index
    %c0_27 = arith.constant 0 : index
    %32 = vector.load %arg6[%c0_26, %c0_27] : memref<32x192xbf16, #tpu.memory_space<vmem>>, vector<32x192xbf16>
    %cst_28 = arith.constant dense<0.000000e+00> : vector<64x192xf32>
    %33 = tpu.matmul %31, %32, %cst_28 {dimension_numbers = #tpu.dot_dimension_numbers<[1], [0], [0], [1], [0, 0, 1, 1], [], []>} : vector<64x32xbf16>, vector<32x192xbf16>, vector<64x192xf32> -> vector<64x192xf32>
    %c0_29 = arith.constant 0 : index
    %c0_30 = arith.constant 0 : index
    %34 = vector.load %arg8[%c0_29, %c0_30] : memref<64x1xf32, #tpu.memory_space<vmem>>, vector<64x1xf32>
    %c0_31 = arith.constant 0 : index
    %c0_32 = arith.constant 0 : index
    %35 = vector.load %arg9[%c0_31, %c0_32] : memref<64x1xf32, #tpu.memory_space<vmem>>, vector<64x1xf32>
    %c0_33 = arith.constant 0 : index
    %c0_34 = arith.constant 0 : index
    %36 = vector.load %arg7[%c0_33, %c0_34] : memref<1x64xf32, #tpu.memory_space<vmem>>, vector<1x64xf32>
    %cst_35 = arith.constant 0.000000e+00 : f32
    %37 = vector.broadcast %cst_35 : f32 to vector<1x192xf32>
    %c0_36 = arith.constant 0 : index
    %c0_37 = arith.constant 0 : index
    %38 = vector.load %arg16[%c0_36, %c0_37] : memref<66x192xf32, #tpu.memory_space<vmem>>, vector<1x192xf32>
    tpu.vector_store %arg16[%c0_36, %c0_37], %37 {strides = array<i32>} : memref<66x192xf32, #tpu.memory_space<vmem>>, vector<1x192xf32>,
    %cst_38 = arith.constant 0.000000e+00 : f32
    %39 = vector.broadcast %cst_38 : f32 to vector<1x192xf32>
    %c65 = arith.constant 65 : index
    %c0_39 = arith.constant 0 : index
    %40 = vector.load %arg16[%c65, %c0_39] : memref<66x192xf32, #tpu.memory_space<vmem>>, vector<1x192xf32>
    tpu.vector_store %arg16[%c65, %c0_39], %39 {strides = array<i32>} : memref<66x192xf32, #tpu.memory_space<vmem>>, vector<1x192xf32>,
    %c1_40 = arith.constant 1 : index
    %c0_41 = arith.constant 0 : index
    %41 = vector.load %arg16[%c1_40, %c0_41] : memref<66x192xf32, #tpu.memory_space<vmem>>, vector<64x192xf32>
    tpu.vector_store %arg16[%c1_40, %c0_41], %33 {strides = array<i32>} : memref<66x192xf32, #tpu.memory_space<vmem>>, vector<64x192xf32>,
    %c0_42 = arith.constant 0 : index
    %c0_43 = arith.constant 0 : index
    %42 = vector.load %arg16[%c0_42, %c0_43] : memref<66x192xf32, #tpu.memory_space<vmem>>, vector<64x64xf32>
    %c1_44 = arith.constant 1 : index
    %c64_45 = arith.constant 64 : index
    %43 = vector.load %arg16[%c1_44, %c64_45] : memref<66x192xf32, #tpu.memory_space<vmem>>, vector<64x64xf32>
    %c2_46 = arith.constant 2 : index
    %c128 = arith.constant 128 : index
    %44 = vector.load %arg16[%c2_46, %c128] : memref<66x192xf32, #tpu.memory_space<vmem>>, vector<64x64xf32>
    %45 = vector.broadcast %34 : vector<64x1xf32> to vector<64x64xf32>
    %46 = arith.mulf %45, %42 : vector<64x64xf32>
    %47 = arith.addf %43, %46 : vector<64x64xf32>
    %48 = vector.broadcast %35 : vector<64x1xf32> to vector<64x64xf32>
    %49 = arith.mulf %48, %44 : vector<64x64xf32>
    %50 = arith.addf %47, %49 : vector<64x64xf32>
    %51 = vector.broadcast %36 : vector<1x64xf32> to vector<64x64xf32>
    %52 = arith.addf %50, %51 : vector<64x64xf32>
    %cst_47 = arith.constant 0.000000e+00 : f32
    %53 = vector.broadcast %cst_47 : f32 to vector<64x64xf32>
    %54 = arith.cmpf ogt, %52, %53 : vector<64x64xf32>
    %cst_48 = arith.constant 2.000000e-01 : f32
    %55 = vector.broadcast %cst_48 : f32 to vector<64x64xf32>
    %56 = arith.mulf %55, %52 : vector<64x64xf32>
    %57 = arith.select %54, %52, %56 : vector<64x64xi1>, vector<64x64xf32>
    %c0_49 = arith.constant 0 : index
    %c0_50 = arith.constant 0 : index
    %58 = vector.load %arg17[%c0_49, %c0_50] : memref<64x64xf32, #tpu.memory_space<vmem>>, vector<64x64xf32>
    tpu.vector_store %arg17[%c0_49, %c0_50], %57 {strides = array<i32>} : memref<64x64xf32, #tpu.memory_space<vmem>>, vector<64x64xf32>,
    %c0_51 = arith.constant 0 : index
    %c0_52 = arith.constant 0 : index
    %59 = tpu.strided_load %arg17[%c0_51, %c0_52] {strides = array<i32: 2, 1>} : memref<64x64xf32, #tpu.memory_space<vmem>>, vector<32x64xf32>
    %c1_53 = arith.constant 1 : index
    %c0_54 = arith.constant 0 : index
    %60 = tpu.strided_load %arg17[%c1_53, %c0_54] {strides = array<i32: 2, 1>} : memref<64x64xf32, #tpu.memory_space<vmem>>, vector<32x64xf32>
    %61 = arith.maximumf %59, %60 : vector<32x64xf32>
    %c0_55 = arith.constant 0 : index
    %c0_56 = arith.constant 0 : index
    %62 = vector.load %arg10[%c0_55, %c0_56] : memref<32x64xf32, #tpu.memory_space<vmem>>, vector<32x64xf32>
    %63 = arith.mulf %61, %62 : vector<32x64xf32>
    %c0_57 = arith.constant 0 : index
    %c0_58 = arith.constant 0 : index
    %64 = vector.load %arg11[%c0_57, %c0_58] : memref<8x32xf32, #tpu.memory_space<vmem>>, vector<8x32xf32>
    %cst_59 = arith.constant dense<0.000000e+00> : vector<8x64xf32>
    %65 = tpu.matmul %64, %63, %cst_59 {dimension_numbers = #tpu.dot_dimension_numbers<[1], [0], [0], [1], [0, 0, 1, 1], [], []>} : vector<8x32xf32>, vector<32x64xf32>, vector<8x64xf32> -> vector<8x64xf32>
    %cst_60 = arith.constant dense<0.000000e+00> : vector<8xf32>
    %66 = vector.multi_reduction <add>, %65, %cst_60 [1] : vector<8x64xf32> to vector<8xf32>
    %67 = vector.shape_cast %66 : vector<8xf32> to vector<8x1xf32>
    %c0_61 = arith.constant 0 : index
    %c0_62 = arith.constant 0 : index
    %68 = vector.load %arg12[%c0_61, %c0_62] : memref<1x1xf32, #tpu.memory_space<vmem>>, vector<1x1xf32>
    %69 = vector.broadcast %68 : vector<1x1xf32> to vector<8x1xf32>
    %70 = arith.addf %67, %69 : vector<8x1xf32>
    %cst_63 = arith.constant 0.000000e+00 : f32
    %71 = vector.broadcast %cst_63 : f32 to vector<8x1xf32>
    %72 = arith.subf %71, %70 : vector<8x1xf32>
    %73 = math.exp %72 : vector<8x1xf32>
    %cst_64 = arith.constant 1.000000e+00 : f32
    %74 = vector.broadcast %cst_64 : f32 to vector<8x1xf32>
    %75 = arith.addf %74, %73 : vector<8x1xf32>
    %cst_65 = arith.constant 1.000000e+00 : f32
    %76 = vector.broadcast %cst_65 : f32 to vector<8x1xf32>
    %77 = arith.divf %76, %75 : vector<8x1xf32>
    %c0_66 = arith.constant 0 : index
    %c0_67 = arith.constant 0 : index
    %78 = vector.load %arg13[%c0_66, %c0_67] : memref<8x1xf32, #tpu.memory_space<vmem>>, vector<8x1xf32>
    tpu.vector_store %arg13[%c0_66, %c0_67], %77 {strides = array<i32>} : memref<8x1xf32, #tpu.memory_space<vmem>>, vector<8x1xf32>,
    return
  }
  func.func @transform_0(%arg0: i32) -> (i32, i32) {
    %c0_i32 = arith.constant 0 : i32
    %c0_i32_0 = arith.constant 0 : i32
    return %arg0, %c0_i32 : i32, i32
  }
  func.func @transform_1(%arg0: i32) -> (i32, i32) {
    %c0_i32 = arith.constant 0 : i32
    %c0_i32_0 = arith.constant 0 : i32
    %c0_i32_1 = arith.constant 0 : i32
    return %c0_i32, %c0_i32_0 : i32, i32
  }
  func.func @transform_2(%arg0: i32) -> (i32, i32) {
    %c0_i32 = arith.constant 0 : i32
    %c0_i32_0 = arith.constant 0 : i32
    %c0_i32_1 = arith.constant 0 : i32
    return %c0_i32, %c0_i32_0 : i32, i32
  }
  func.func @transform_3(%arg0: i32) -> (i32, i32) {
    %c0_i32 = arith.constant 0 : i32
    %c0_i32_0 = arith.constant 0 : i32
    %c0_i32_1 = arith.constant 0 : i32
    return %c0_i32, %c0_i32_0 : i32, i32
  }
  func.func @transform_4(%arg0: i32) -> (i32, i32) {
    %c0_i32 = arith.constant 0 : i32
    %c0_i32_0 = arith.constant 0 : i32
    %c0_i32_1 = arith.constant 0 : i32
    return %c0_i32, %c0_i32_0 : i32, i32
  }
  func.func @transform_5(%arg0: i32) -> (i32, i32) {
    %c0_i32 = arith.constant 0 : i32
    %c0_i32_0 = arith.constant 0 : i32
    %c0_i32_1 = arith.constant 0 : i32
    return %c0_i32, %c0_i32_0 : i32, i32
  }
  func.func @transform_6(%arg0: i32) -> (i32, i32) {
    %c0_i32 = arith.constant 0 : i32
    %c0_i32_0 = arith.constant 0 : i32
    %c0_i32_1 = arith.constant 0 : i32
    return %c0_i32, %c0_i32_0 : i32, i32
  }
  func.func @transform_7(%arg0: i32) -> (i32, i32) {
    %c0_i32 = arith.constant 0 : i32
    %c0_i32_0 = arith.constant 0 : i32
    %c0_i32_1 = arith.constant 0 : i32
    return %c0_i32, %c0_i32_0 : i32, i32
  }
  func.func @transform_8(%arg0: i32) -> (i32, i32) {
    %c0_i32 = arith.constant 0 : i32
    %c0_i32_0 = arith.constant 0 : i32
    %c0_i32_1 = arith.constant 0 : i32
    return %c0_i32, %c0_i32_0 : i32, i32
  }
  func.func @transform_9(%arg0: i32) -> (i32, i32) {
    %c0_i32 = arith.constant 0 : i32
    %c0_i32_0 = arith.constant 0 : i32
    %c0_i32_1 = arith.constant 0 : i32
    return %c0_i32, %c0_i32_0 : i32, i32
  }
  func.func @transform_10(%arg0: i32) -> (i32, i32) {
    %c0_i32 = arith.constant 0 : i32
    %c0_i32_0 = arith.constant 0 : i32
    %c0_i32_1 = arith.constant 0 : i32
    return %c0_i32, %c0_i32_0 : i32, i32
  }
  func.func @transform_11(%arg0: i32) -> (i32, i32) {
    %c0_i32 = arith.constant 0 : i32
    %c0_i32_0 = arith.constant 0 : i32
    %c0_i32_1 = arith.constant 0 : i32
    return %c0_i32, %c0_i32_0 : i32, i32
  }
  func.func @transform_12(%arg0: i32) -> (i32, i32) {
    %c0_i32 = arith.constant 0 : i32
    %c0_i32_0 = arith.constant 0 : i32
    return %arg0, %c0_i32 : i32, i32
  }
}

</mosaic_0001>

<llo_original>
// kernel: tpu_custom_call.1
$region0: #{tpu_custom_call.1}
  #allocation0 [shape = 'u32[]', space=smem, size = 0x4, offset = 0x4, fixed_abs, tag = 'smem constant byte address 0x4 - core index']
  #allocation1 [shape = 'u32[144,128]{1,0:T(1,128)}', space=vmem, size = 0x12000, scoped, tag = 'internal scratch']
  #allocation2 [shape = 'f32[130,96]{1,0:T(8,128)}', space=vmem, size = 0x11000, scoped, tag = 'scratch operand']
  #allocation3 [shape = 'f32[128,32]{1,0:T(8,128)}', space=vmem, size = 0x10000, scoped, tag = 'scratch operand']
  #allocation4 [shape = 'f32[66,192]{1,0:T(8,128)}', space=vmem, size = 0x12000, scoped, tag = 'scratch operand']
  #allocation5 [shape = 'f32[64,64]{1,0:T(8,128)}', space=vmem, size = 0x8000, scoped, tag = 'scratch operand']
  #allocation6 [shape = 'f32[1,1]{1,0:T(1,128)S(1)}', space=vmem, size = 0x200, scoped, tag = 'scoped memory for tpu_custom_call.1']
  %s0 = inlined_call_operand.vmem [shape: bf16[256,4], index: 0, kind: input, shape index: {}]
  %s1 = inlined_call_operand.vmem [shape: bf16[4,96], index: 1, kind: input, shape index: {}]
  %s2 = inlined_call_operand.vmem [shape: f32[1,32], index: 2, kind: input, shape index: {}]
  %s3 = inlined_call_operand.vmem [shape: f32[128,1], index: 3, kind: input, shape index: {}]
  %s4 = inlined_call_operand.vmem [shape: f32[128,1], index: 4, kind: input, shape index: {}]
  %s5 = inlined_call_operand.vmem [shape: bf16[32,192], index: 5, kind: input, shape index: {}]
  %s6 = inlined_call_operand.vmem [shape: f32[1,64], index: 6, kind: input, shape index: {}]
  %s7 = inlined_call_operand.vmem [shape: f32[64,1], index: 7, kind: input, shape index: {}]
  %s8 = inlined_call_operand.vmem [shape: f32[64,1], index: 8, kind: input, shape index: {}]
  %s9 = inlined_call_operand.vmem [shape: f32[32,64], index: 9, kind: input, shape index: {}]
  %s10 = inlined_call_operand.vmem [shape: f32[8,32], index: 10, kind: input, shape index: {}]
  %s11 = inlined_call_operand.<no memory space> [shape: f32[1,1], index: 11, kind: input, shape index: {}]
  %s12 = inlined_call_operand.vmem [shape: f32[16,1], index: 12, kind: output, shape index: {}]
  %s13 = sld [smem:[#allocation0]]
  $region81: #{tpu_custom_call.1} parent=0
    _
  %s15 = ssub.s32 1, %s13
  %s16 = scalar_select 0, %s15, %s13
  %v17 = vstv %s11
  %18 = vst [vmem:[#allocation6] sm:$0x1] %v17
  loop: start=0, step=1, limit=4
  $region2: #{tpu_custom_call.1} parent=0 // loop_pre_header
    _
  $region3: #{tpu_custom_call.1} parent=0 // loop_header
    %s20 = sphi 0, %s24
    %p21 = scmp.ge.s32.totalorder %s20, 4
    %s30 = sphi 0, %s32
    %s33 = sphi 0, %s30
    %s34 = sphi 0, %s33
    %s50 = sphi 0, %s34
    %s54 = sphi 0, %s54
    %s56 = sphi 0, %s54
    %s57 = sphi 0, %s56
    %s71 = sphi 0, %s57
    %s75 = sphi 0, %s75
    %s77 = sphi 0, %s75
    %s78 = sphi 0, %s77
    %s92 = sphi 0, %s78
    %s96 = sphi 0, %s96
    %s98 = sphi 0, %s96
    %s99 = sphi 0, %s98
    %s113 = sphi 0, %s99
    %s117 = sphi 0, %s117
    %s119 = sphi 0, %s117
    %s120 = sphi 0, %s119
    %s134 = sphi 0, %s120
    %s138 = sphi 0, %s138
    %s140 = sphi 0, %s138
    %s141 = sphi 0, %s140
    %s155 = sphi 0, %s141
    %s159 = sphi 0, %s159
    %s161 = sphi 0, %s159
    %s162 = sphi 0, %s161
    %s176 = sphi 0, %s162
    %s180 = sphi 0, %s180
    %s182 = sphi 0, %s180
    %s183 = sphi 0, %s182
    %s197 = sphi 0, %s183
    %s201 = sphi 0, %s201
    %s203 = sphi 0, %s201
    %s204 = sphi 0, %s203
    %s218 = sphi 0, %s204
    %s222 = sphi 0, %s222
    %s224 = sphi 0, %s222
    %s225 = sphi 0, %s224
    %s239 = sphi 0, %s225
    %s243 = sphi 0, %s243
    %s245 = sphi 0, %s243
    %s246 = sphi 0, %s245
    %s260 = sphi 0, %s246
    %s264 = sphi 0, %s264
    %s266 = sphi 0, %s264
    %s267 = sphi 0, %s266
    %s281 = sphi 0, %s267
    %s287 = sphi 0, %s289
    %s290 = sphi 0, %s287
    %s291 = sphi 0, %s290
    %s307 = sphi 0, %s291
  $region4: #{tpu_custom_call.1} parent=0 // loop_header_branch
    %23 = sbr.rel (%p21) target = $region8
  $region5: #{tpu_custom_call.1} parent=0 // loop_body
    %s25 = ssub.s32 %s20, 1
    %s26 = ssub.s32 %s20, 2
    %s27 = sadd.s32 %s20, 1
    %s28 = ssub.s32 %s20, %s27
    %p29 = scmp.eq.s32.totalorder %s28, 0
    %s31 = sadd.s32 %s30, 1
    %s32 = scalar_select %p29, %s30, %s31
    %p35 = pneg %p29
    %p36 = scmp.eq.s32.totalorder %s20, 1
    %p37 = por %p35, %p36
    %p38 = scmp.ne.s32.totalorder %s30, %s33
    %p39 = scmp.eq.s32.totalorder %s20, 0
    %p40 = por %p38, %p39
    %p41 = scmp.ne.s32.totalorder %s30, %s33
    %p42 = scmp.eq.s32.totalorder %s25, 1
    %p43 = por %p41, %p42
    %p44 = scmp.ne.s32.totalorder %s33, %s34
    %p45 = scmp.eq.s32.totalorder %s25, 0
    %p46 = por %p44, %p45
    %p47 = scmp.ne.s32.totalorder %s33, %s34
    %p48 = scmp.eq.s32.totalorder %s26, 1
    %p49 = por %p47, %p48
    %p51 = scmp.ne.s32.totalorder %s34, %s50
    %p52 = scmp.eq.s32.totalorder %s26, 0
    %p53 = por %p51, %p52
    %s55 = sadd.s32 %s54, 1
    %p58 = scmp.eq.s32.totalorder %s20, 1
    %p59 = scmp.ne.s32.totalorder %s54, %s56
    %p60 = scmp.eq.s32.totalorder %s20, 0
    %p61 = por %p59, %p60
    %p62 = scmp.ne.s32.totalorder %s54, %s56
    %p63 = scmp.eq.s32.totalorder %s25, 1
    %p64 = por %p62, %p63
    %p65 = scmp.ne.s32.totalorder %s56, %s57
    %p66 = scmp.eq.s32.totalorder %s25, 0
    %p67 = por %p65, %p66
    %p68 = scmp.ne.s32.totalorder %s56, %s57
    %p69 = scmp.eq.s32.totalorder %s26, 1
    %p70 = por %p68, %p69
    %p72 = scmp.ne.s32.totalorder %s57, %s71
    %p73 = scmp.eq.s32.totalorder %s26, 0
    %p74 = por %p72, %p73
    %s76 = sadd.s32 %s75, 1
    %p79 = scmp.eq.s32.totalorder %s20, 1
    %p80 = scmp.ne.s32.totalorder %s75, %s77
    %p81 = scmp.eq.s32.totalorder %s20, 0
    %p82 = por %p80, %p81
    %p83 = scmp.ne.s32.totalorder %s75, %s77
    %p84 = scmp.eq.s32.totalorder %s25, 1
    %p85 = por %p83, %p84
    %p86 = scmp.ne.s32.totalorder %s77, %s78
    %p87 = scmp.eq.s32.totalorder %s25, 0
    %p88 = por %p86, %p87
    %p89 = scmp.ne.s32.totalorder %s77, %s78
    %p90 = scmp.eq.s32.totalorder %s26, 1
    %p91 = por %p89, %p90
    %p93 = scmp.ne.s32.totalorder %s78, %s92
    %p94 = scmp.eq.s32.totalorder %s26, 0
    %p95 = por %p93, %p94
    %s97 = sadd.s32 %s96, 1
    %p100 = scmp.eq.s32.totalorder %s20, 1
    %p101 = scmp.ne.s32.totalorder %s96, %s98
    %p102 = scmp.eq.s32.totalorder %s20, 0
    %p103 = por %p101, %p102
    %p104 = scmp.ne.s32.totalorder %s96, %s98
    %p105 = scmp.eq.s32.totalorder %s25, 1
    %p106 = por %p104, %p105
    %p107 = scmp.ne.s32.totalorder %s98, %s99
    %p108 = scmp.eq.s32.totalorder %s25, 0
    %p109 = por %p107, %p108
    %p110 = scmp.ne.s32.totalorder %s98, %s99
    %p111 = scmp.eq.s32.totalorder %s26, 1
    %p112 = por %p110, %p111
    %p114 = scmp.ne.s32.totalorder %s99, %s113
    %p115 = scmp.eq.s32.totalorder %s26, 0
    %p116 = por %p114, %p115
    %s118 = sadd.s32 %s117, 1
    %p121 = scmp.eq.s32.totalorder %s20, 1
    %p122 = scmp.ne.s32.totalorder %s117, %s119
    %p123 = scmp.eq.s32.totalorder %s20, 0
    %p124 = por %p122, %p123
    %p125 = scmp.ne.s32.totalorder %s117, %s119
    %p126 = scmp.eq.s32.totalorder %s25, 1
    %p127 = por %p125, %p126
    %p128 = scmp.ne.s32.totalorder %s119, %s120
    %p129 = scmp.eq.s32.totalorder %s25, 0
    %p130 = por %p128, %p129
    %p131 = scmp.ne.s32.totalorder %s119, %s120
    %p132 = scmp.eq.s32.totalorder %s26, 1
    %p133 = por %p131, %p132
    %p135 = scmp.ne.s32.totalorder %s120, %s134
    %p136 = scmp.eq.s32.totalorder %s26, 0
    %p137 = por %p135, %p136
    %s139 = sadd.s32 %s138, 1
    %p142 = scmp.eq.s32.totalorder %s20, 1
    %p143 = scmp.ne.s32.totalorder %s138, %s140
    %p144 = scmp.eq.s32.totalorder %s20, 0
    %p145 = por %p143, %p144
    %p146 = scmp.ne.s32.totalorder %s138, %s140
    %p147 = scmp.eq.s32.totalorder %s25, 1
    %p148 = por %p146, %p147
    %p149 = scmp.ne.s32.totalorder %s140, %s141
    %p150 = scmp.eq.s32.totalorder %s25, 0
    %p151 = por %p149, %p150
    %p152 = scmp.ne.s32.totalorder %s140, %s141
    %p153 = scmp.eq.s32.totalorder %s26, 1
    %p154 = por %p152, %p153
    %p156 = scmp.ne.s32.totalorder %s141, %s155
    %p157 = scmp.eq.s32.totalorder %s26, 0
    %p158 = por %p156, %p157
    %s160 = sadd.s32 %s159, 1
    %p163 = scmp.eq.s32.totalorder %s20, 1
    %p164 = scmp.ne.s32.totalorder %s159, %s161
    %p165 = scmp.eq.s32.totalorder %s20, 0
    %p166 = por %p164, %p165
    %p167 = scmp.ne.s32.totalorder %s159, %s161
    %p168 = scmp.eq.s32.totalorder %s25, 1
    %p169 = por %p167, %p168
    %p170 = scmp.ne.s32.totalorder %s161, %s162
    %p171 = scmp.eq.s32.totalorder %s25, 0
    %p172 = por %p170, %p171
    %p173 = scmp.ne.s32.totalorder %s161, %s162
    %p174 = scmp.eq.s32.totalorder %s26, 1
    %p175 = por %p173, %p174
    %p177 = scmp.ne.s32.totalorder %s162, %s176
    %p178 = scmp.eq.s32.totalorder %s26, 0
    %p179 = por %p177, %p178
    %s181 = sadd.s32 %s180, 1
    %p184 = scmp.eq.s32.totalorder %s20, 1
    %p185 = scmp.ne.s32.totalorder %s180, %s182
    %p186 = scmp.eq.s32.totalorder %s20, 0
    %p187 = por %p185, %p186
    %p188 = scmp.ne.s32.totalorder %s180, %s182
    %p189 = scmp.eq.s32.totalorder %s25, 1
    %p190 = por %p188, %p189
    %p191 = scmp.ne.s32.totalorder %s182, %s183
    %p192 = scmp.eq.s32.totalorder %s25, 0
    %p193 = por %p191, %p192
    %p194 = scmp.ne.s32.totalorder %s182, %s183
    %p195 = scmp.eq.s32.totalorder %s26, 1
    %p196 = por %p194, %p195
    %p198 = scmp.ne.s32.totalorder %s183, %s197
    %p199 = scmp.eq.s32.totalorder %s26, 0
    %p200 = por %p198, %p199
    %s202 = sadd.s32 %s201, 1
    %p205 = scmp.eq.s32.totalorder %s20, 1
    %p206 = scmp.ne.s32.totalorder %s201, %s203
    %p207 = scmp.eq.s32.totalorder %s20, 0
    %p208 = por %p206, %p207
    %p209 = scmp.ne.s32.totalorder %s201, %s203
    %p210 = scmp.eq.s32.totalorder %s25, 1
    %p211 = por %p209, %p210
    %p212 = scmp.ne.s32.totalorder %s203, %s204
    %p213 = scmp.eq.s32.totalorder %s25, 0
    %p214 = por %p212, %p213
    %p215 = scmp.ne.s32.totalorder %s203, %s204
    %p216 = scmp.eq.s32.totalorder %s26, 1
    %p217 = por %p215, %p216
    %p219 = scmp.ne.s32.totalorder %s204, %s218
    %p220 = scmp.eq.s32.totalorder %s26, 0
    %p221 = por %p219, %p220
    %s223 = sadd.s32 %s222, 1
    %p226 = scmp.eq.s32.totalorder %s20, 1
    %p227 = scmp.ne.s32.totalorder %s222, %s224
    %p228 = scmp.eq.s32.totalorder %s20, 0
    %p229 = por %p227, %p228
    %p230 = scmp.ne.s32.totalorder %s222, %s224
    %p231 = scmp.eq.s32.totalorder %s25, 1
    %p232 = por %p230, %p231
    %p233 = scmp.ne.s32.totalorder %s224, %s225
    %p234 = scmp.eq.s32.totalorder %s25, 0
    %p235 = por %p233, %p234
    %p236 = scmp.ne.s32.totalorder %s224, %s225
    %p237 = scmp.eq.s32.totalorder %s26, 1
    %p238 = por %p236, %p237
    %p240 = scmp.ne.s32.totalorder %s225, %s239
    %p241 = scmp.eq.s32.totalorder %s26, 0
    %p242 = por %p240, %p241
    %s244 = sadd.s32 %s243, 1
    %p247 = scmp.eq.s32.totalorder %s20, 1
    %p248 = scmp.ne.s32.totalorder %s243, %s245
    %p249 = scmp.eq.s32.totalorder %s20, 0
    %p250 = por %p248, %p249
    %p251 = scmp.ne.s32.totalorder %s243, %s245
    %p252 = scmp.eq.s32.totalorder %s25, 1
    %p253 = por %p251, %p252
    %p254 = scmp.ne.s32.totalorder %s245, %s246
    %p255 = scmp.eq.s32.totalorder %s25, 0
    %p256 = por %p254, %p255
    %p257 = scmp.ne.s32.totalorder %s245, %s246
    %p258 = scmp.eq.s32.totalorder %s26, 1
    %p259 = por %p257, %p258
    %p261 = scmp.ne.s32.totalorder %s246, %s260
    %p262 = scmp.eq.s32.totalorder %s26, 0
    %p263 = por %p261, %p262
    %s265 = sadd.s32 %s264, 1
    %p268 = scmp.eq.s32.totalorder %s20, 1
    %p269 = scmp.ne.s32.totalorder %s264, %s266
    %p270 = scmp.eq.s32.totalorder %s20, 0
    %p271 = por %p269, %p270
    %p272 = scmp.ne.s32.totalorder %s264, %s266
    %p273 = scmp.eq.s32.totalorder %s25, 1
    %p274 = por %p272, %p273
    %p275 = scmp.ne.s32.totalorder %s266, %s267
    %p276 = scmp.eq.s32.totalorder %s25, 0
    %p277 = por %p275, %p276
    %p278 = scmp.ne.s32.totalorder %s266, %s267
    %p279 = scmp.eq.s32.totalorder %s26, 1
    %p280 = por %p278, %p279
    %p282 = scmp.ne.s32.totalorder %s267, %s281
    %p283 = scmp.eq.s32.totalorder %s26, 0
    %p284 = por %p282, %p283
    %s285 = ssub.s32 %s20, %s27
    %p286 = scmp.eq.s32.totalorder %s285, 0
    %s288 = sadd.s32 %s287, 1
    %s289 = scalar_select %p286, %s287, %s288
    %p292 = pneg %p286
    %p293 = scmp.eq.s32.totalorder %s20, 1
    %p294 = por %p292, %p293
    %p295 = scmp.ne.s32.totalorder %s287, %s290
    %p296 = scmp.eq.s32.totalorder %s20, 0
    %p297 = por %p295, %p296
    %p298 = scmp.ne.s32.totalorder %s287, %s290
    %p299 = scmp.eq.s32.totalorder %s25, 1
    %p300 = por %p298, %p299
    %p301 = scmp.ne.s32.totalorder %s290, %s291
    %p302 = scmp.eq.s32.totalorder %s25, 0
    %p303 = por %p301, %p302
    %p304 = scmp.ne.s32.totalorder %s290, %s291
    %p305 = scmp.eq.s32.totalorder %s26, 1
    %p306 = por %p304, %p305
    %p308 = scmp.ne.s32.totalorder %s291, %s307
    %p309 = scmp.eq.s32.totalorder %s26, 0
    %p310 = por %p308, %p309
    %p311 = scmp.le.s32.totalorder 1, %s20
    %p312 = scmp.lt.s32.totalorder %s20, 3
    %p313 = pnand %p311, %p312
    %p314 = pneg %p313
    // Predicated region
    $region9: #{tpu_custom_call.1} parent=5 // pred_check
      _
    $region10: #{tpu_custom_call.1} parent=5 // pred_check_branch
      %316 = sbr.rel (%p313) target = $region12
    $region11: #{tpu_custom_call.1} parent=5 // pred_region
      %s317 = ssub.s32 %s20, 1
      // Predicated region
      $region13: #{tpu_custom_call.1} parent=11 // pred_check
        %p318 = pneg %p67
      $region14: #{tpu_custom_call.1} parent=11 // pred_check_branch
        %320 = sbr.rel (%p318) target = $region16
      $region15: #{tpu_custom_call.1} parent=11 // pred_region
        _
      $region16: #{tpu_custom_call.1} parent=11 // pred_fallthru
        _
      // Predicated region
      $region17: #{tpu_custom_call.1} parent=11 // pred_check
        %p321 = pneg %p88
      $region18: #{tpu_custom_call.1} parent=11 // pred_check_branch
        %323 = sbr.rel (%p321) target = $region20
      $region19: #{tpu_custom_call.1} parent=11 // pred_region
        _
      $region20: #{tpu_custom_call.1} parent=11 // pred_fallthru
        _
      // Predicated region
      $region21: #{tpu_custom_call.1} parent=11 // pred_check
        %p324 = pneg %p109
      $region22: #{tpu_custom_call.1} parent=11 // pred_check_branch
        %326 = sbr.rel (%p324) target = $region24
      $region23: #{tpu_custom_call.1} parent=11 // pred_region
        _
      $region24: #{tpu_custom_call.1} parent=11 // pred_fallthru
        _
      // Predicated region
      $region25: #{tpu_custom_call.1} parent=11 // pred_check
        %p327 = pneg %p130
      $region26: #{tpu_custom_call.1} parent=11 // pred_check_branch
        %329 = sbr.rel (%p327) target = $region28
      $region27: #{tpu_custom_call.1} parent=11 // pred_region
        _
      $region28: #{tpu_custom_call.1} parent=11 // pred_fallthru
        _
      // Predicated region
      $region29: #{tpu_custom_call.1} parent=11 // pred_check
        %p330 = pneg %p151
      $region30: #{tpu_custom_call.1} parent=11 // pred_check_branch
        %332 = sbr.rel (%p330) target = $region32
      $region31: #{tpu_custom_call.1} parent=11 // pred_region
        _
      $region32: #{tpu_custom_call.1} parent=11 // pred_fallthru
        _
      // Predicated region
      $region33: #{tpu_custom_call.1} parent=11 // pred_check
        %p333 = pneg %p172
      $region34: #{tpu_custom_call.1} parent=11 // pred_check_branch
        %335 = sbr.rel (%p333) target = $region36
      $region35: #{tpu_custom_call.1} parent=11 // pred_region
        _
      $region36: #{tpu_custom_call.1} parent=11 // pred_fallthru
        _
      // Predicated region
      $region37: #{tpu_custom_call.1} parent=11 // pred_check
        %p336 = pneg %p193
      $region38: #{tpu_custom_call.1} parent=11 // pred_check_branch
        %338 = sbr.rel (%p336) target = $region40
      $region39: #{tpu_custom_call.1} parent=11 // pred_region
        _
      $region40: #{tpu_custom_call.1} parent=11 // pred_fallthru
        _
      // Predicated region
      $region41: #{tpu_custom_call.1} parent=11 // pred_check
        %p339 = pneg %p214
      $region42: #{tpu_custom_call.1} parent=11 // pred_check_branch
        %341 = sbr.rel (%p339) target = $region44
      $region43: #{tpu_custom_call.1} parent=11 // pred_region
        _
      $region44: #{tpu_custom_call.1} parent=11 // pred_fallthru
        _
      // Predicated region
      $region45: #{tpu_custom_call.1} parent=11 // pred_check
        %p342 = pneg %p235
      $region46: #{tpu_custom_call.1} parent=11 // pred_check_branch
        %344 = sbr.rel (%p342) target = $region48
      $region47: #{tpu_custom_call.1} parent=11 // pred_region
        _
      $region48: #{tpu_custom_call.1} parent=11 // pred_fallthru
        _
      // Predicated region
      $region49: #{tpu_custom_call.1} parent=11 // pred_check
        %p345 = pneg %p256
      $region50: #{tpu_custom_call.1} parent=11 // pred_check_branch
        %347 = sbr.rel (%p345) target = $region52
      $region51: #{tpu_custom_call.1} parent=11 // pred_region
        _
      $region52: #{tpu_custom_call.1} parent=11 // pred_fallthru
        _
      // Predicated region
      $region53: #{tpu_custom_call.1} parent=11 // pred_check
        %p348 = pneg %p277
      $region54: #{tpu_custom_call.1} parent=11 // pred_check_branch
        %350 = sbr.rel (%p348) target = $region56
      $region55: #{tpu_custom_call.1} parent=11 // pred_region
        _
      $region56: #{tpu_custom_call.1} parent=11 // pred_fallthru
        _
    $region12: #{tpu_custom_call.1} parent=5 // pred_fallthru
      _
    %p351 = scmp.lt.s32.totalorder %s20, 2
    // Predicated region
    $region57: #{tpu_custom_call.1} parent=5 // pred_check
      %p352 = pneg %p351
    $region58: #{tpu_custom_call.1} parent=5 // pred_check_branch
      %354 = sbr.rel (%p352) target = $region60
    $region59: #{tpu_custom_call.1} parent=5 // pred_region
      // Predicated region
      $region61: #{tpu_custom_call.1} parent=59 // pred_check
        %p355 = pneg %p40
      $region62: #{tpu_custom_call.1} parent=59 // pred_check_branch
        %357 = sbr.rel (%p355) target = $region64
      $region63: #{tpu_custom_call.1} parent=59 // pred_region
        %s358 = smul.u32 16, %s20
        %p359 = scmp.lt.s32.totalorder %s358, 31
        %s360 = scalar_select %p359, %s358, 31
        %s361 = smul.addr %s360, 4
        %s362 = scalar_lea.vmem %s0, %s361
        %s363 = smul.u32 16, %s20
      $region64: #{tpu_custom_call.1} parent=59 // pred_fallthru
        _
    $region60: #{tpu_custom_call.1} parent=5 // pred_fallthru
      _
    %p364 = scmp.le.s32.totalorder 1, %s20
    %p365 = scmp.lt.s32.totalorder %s20, 3
    %p366 = pnand %p364, %p365
    %p367 = pneg %p366
    // Predicated region
    $region65: #{tpu_custom_call.1} parent=5 // pred_check
      _
    $region66: #{tpu_custom_call.1} parent=5 // pred_check_branch
      %369 = sbr.rel (%p366) target = $region68
    $region67: #{tpu_custom_call.1} parent=5 // pred_region
      %s370 = ssub.s32 %s20, 1
      %s371 = smul.u32 16, %s25
      %p372 = scmp.lt.s32.totalorder %s371, 31
      %s373 = scalar_select %p372, %s371, 31
      %s374 = smul.addr %s373, 4
      %s375 = scalar_lea.vmem %s0, %s374
      %p376 = pneg %p46
      %p377 = pneg %p43
      %p378 = pneg %p67
      %p379 = pneg %p64
      %p380 = pneg %p88
      %p381 = pneg %p85
      %p382 = pneg %p109
      %p383 = pneg %p106
      %p384 = pneg %p130
      %p385 = pneg %p127
      %p386 = pneg %p151
      %p387 = pneg %p148
      %p388 = pneg %p172
      %p389 = pneg %p169
      %p390 = pneg %p193
      %p391 = pneg %p190
      %p392 = pneg %p214
      %p393 = pneg %p211
      %p394 = pneg %p235
      %p395 = pneg %p232
      %p396 = pneg %p256
      %p397 = pneg %p253
      %p398 = pneg %p277
      %p399 = pneg %p274
      %p400 = pneg %p303
      %p401 = pneg %p300
      %p402 = scmp.lt.s32.totalorder %s25, 1
      %s403 = scalar_select %p402, %s25, 1
      %s404 = smul.addr %s403, 8
      %s405 = scalar_lea.vmem %s12, %s404
      %s406 = smul.u32 16, %s25
      %p407 = scmp.lt.s32.totalorder %s406, 31
      %s408 = scalar_select %p407, %s406, 31
      %s409 = smul.addr %s408, 4
      %s410 = scalar_lea.vmem %s0, %s409
      %s411 = smul.u32 16, %s25
      %p412 = scmp.lt.s32.totalorder %s25, 1
      %s413 = scalar_select %p412, %s25, 1
      %s414 = smul.addr %s413, 8
      %s415 = scalar_lea.vmem %s12, %s414
      %v417 = vld [vmem:[%s410] sm:$0xf]
      %v418 = vld [vmem:[%s410 + $0x4] sm:$0xf]
      %v419 = vld [vmem:[%s410 + $0x8] sm:$0xf]
      %v420 = vld [vmem:[%s410 + $0xc] sm:$0xf]
      %v421 = vld [vmem:[%s410 + $0x10] sm:$0xf]
      %v422 = vld [vmem:[%s410 + $0x14] sm:$0xf]
      %v423 = vld [vmem:[%s410 + $0x18] sm:$0xf]
      %v424 = vld [vmem:[%s410 + $0x1c] sm:$0xf]
      %v425 = vld [vmem:[%s410 + $0x20] sm:$0xf]
      %v426 = vld [vmem:[%s410 + $0x24] sm:$0xf]
      %v427 = vld [vmem:[%s410 + $0x28] sm:$0xf]
      %v428 = vld [vmem:[%s410 + $0x2c] sm:$0xf]
      %v429 = vld [vmem:[%s410 + $0x30] sm:$0xf]
      %v430 = vld [vmem:[%s410 + $0x34] sm:$0xf]
      %v431 = vld [vmem:[%s410 + $0x38] sm:$0xf]
      %v432 = vld [vmem:[%s410 + $0x3c] sm:$0xf]
      %v433 = vld [vmem:[%s1] sm:$0x3]
      %v450 = vunpack.c.l.b16 %v417
      %v451 = vunpack.c.l.b16 %v418
      %v452 = vunpack.c.l.b16 %v419
      %v453 = vunpack.c.l.b16 %v420
      %v454 = vunpack.c.l.b16 %v421
      %v455 = vunpack.c.l.b16 %v422
      %v456 = vunpack.c.l.b16 %v423
      %v457 = vunpack.c.l.b16 %v424
      %v458 = vunpack.c.l.b16 %v425
      %v459 = vunpack.c.l.b16 %v426
      %v460 = vunpack.c.l.b16 %v427
      %v461 = vunpack.c.l.b16 %v428
      %v462 = vunpack.c.l.b16 %v429
      %v463 = vunpack.c.l.b16 %v430
      %v464 = vunpack.c.l.b16 %v431
      %v465 = vunpack.c.l.b16 %v432
      %v466 = vpack.c.b16 %v451, %v450
      %v467 = vpack.c.b16 %v453, %v452
      %v468 = vpack.c.b16 %v455, %v454
      %v469 = vpack.c.b16 %v457, %v456
      %v470 = vpack.c.b16 %v459, %v458
      %v471 = vpack.c.b16 %v461, %v460
      %v472 = vpack.c.b16 %v463, %v462
      %v473 = vpack.c.b16 %v465, %v464
      %vm474 = vcmask 31744
      %v476 = vsel %vm474, %v466, 0
      %v479 = vsel %vm474, %v467, 0
      %v482 = vsel %vm474, %v468, 0
      %v485 = vsel %vm474, %v469, 0
      %v488 = vsel %vm474, %v470, 0
      %v491 = vsel %vm474, %v471, 0
      %v494 = vsel %vm474, %v472, 0
      %v497 = vsel %vm474, %v473, 0
      %vm499 = vcmask 1041408
      %v501 = vsel %vm499, %v433, 0
      %503 = vmatprep.subr.bf16.mxu0 0
      %504 = vmatpush1.bf16.msra.mxu0 0
      %505 = vmatprep.subr.bf16.mxu0 0
      %506 = vmatpush1.bf16.msra.mxu0 0
      %507 = vmatprep.subr.bf16.mxu0 0
      %508 = vmatpush1.bf16.msra.mxu0 0
      %509 = vmatprep.subr.bf16.mxu0 0
      %510 = vmatpush1.bf16.msra.mxu0 0
      %511 = vmatprep.subr.bf16.mxu0 0
      %512 = vmatpush1.bf16.msra.mxu0 0
      %513 = vmatprep.subr.bf16.mxu0 0
      %514 = vmatpush1.bf16.msra.mxu0 0
      %515 = vmatprep.subr.bf16.mxu0 0
      %516 = vmatpush1.bf16.msra.mxu0 0
      %517 = vmatprep.subr.bf16.mxu0 0
      %518 = vmatpush1.bf16.msra.mxu0 %v501
      %519 = vmatprep.subr.bf16.mxu0 0
      %520 = vmatpush2.bf16.msra.mxu0 0
      %521 = vmatprep.subr.bf16.mxu0 0
      %522 = vmatpush2.bf16.msra.mxu0 0
      %523 = vmatprep.subr.bf16.mxu0 0
      %524 = vmatpush2.bf16.msra.mxu0 0
      %525 = vmatprep.subr.bf16.mxu0 0
      %526 = vmatpush2.bf16.msra.mxu0 0
      %527 = vmatprep.subr.bf16.mxu0 0
      %528 = vmatpush2.bf16.msra.mxu0 0
      %529 = vmatprep.subr.bf16.mxu0 0
      %530 = vmatpush2.bf16.msra.mxu0 0
      %531 = vmatprep.subr.bf16.mxu0 0
      %532 = vmatpush2.bf16.msra.mxu0 0
      %533 = vmatprep.subr.bf16.mxu0 0
      %534 = vmatpush2.bf16.msra.mxu0 0
      %535 = vmatprep.mubr.bf16.mxu0 0
      %536 = vmatmul.mubr.bf16.gmra.mxu0 %v476
      %v537 = vpop.f32.mrf.mxu0
      %v538 = vadd.f32 0.0, %v537
      %v539 = vpop.f32.mrf.mxu0
      %v540 = vpop.f32.mrf.mxu0
      %v541 = vadd.f32 0.0, %v540
      %v542 = vpop.f32.mrf.mxu0
      %543 = vmatprep.mubr.bf16.mxu0 0
      %544 = vmatmul.mubr.bf16.gmra.mxu0 %v479
      %v545 = vpop.f32.mrf.mxu0
      %v546 = vadd.f32 0.0, %v545
      %v547 = vpop.f32.mrf.mxu0
      %v548 = vpop.f32.mrf.mxu0
      %v549 = vadd.f32 0.0, %v548
      %v550 = vpop.f32.mrf.mxu0
      %551 = vmatprep.mubr.bf16.mxu0 0
      %552 = vmatmul.mubr.bf16.gmra.mxu0 %v482
      %v553 = vpop.f32.mrf.mxu0
      %v554 = vadd.f32 0.0, %v553
      %v555 = vpop.f32.mrf.mxu0
      %v556 = vpop.f32.mrf.mxu0
      %v557 = vadd.f32 0.0, %v556
      %v558 = vpop.f32.mrf.mxu0
      %559 = vmatprep.mubr.bf16.mxu0 0
      %560 = vmatmul.mubr.bf16.gmra.mxu0 %v485
      %v561 = vpop.f32.mrf.mxu0
      %v562 = vadd.f32 0.0, %v561
      %v563 = vpop.f32.mrf.mxu0
      %v564 = vpop.f32.mrf.mxu0
      %v565 = vadd.f32 0.0, %v564
      %v566 = vpop.f32.mrf.mxu0
      %567 = vmatprep.mubr.bf16.mxu0 0
      %568 = vmatmul.mubr.bf16.gmra.mxu0 %v488
      %v569 = vpop.f32.mrf.mxu0
      %v570 = vadd.f32 0.0, %v569
      %v571 = vpop.f32.mrf.mxu0
      %v572 = vpop.f32.mrf.mxu0
      %v573 = vadd.f32 0.0, %v572
      %v574 = vpop.f32.mrf.mxu0
      %575 = vmatprep.mubr.bf16.mxu0 0
      %576 = vmatmul.mubr.bf16.gmra.mxu0 %v491
      %v577 = vpop.f32.mrf.mxu0
      %v578 = vadd.f32 0.0, %v577
      %v579 = vpop.f32.mrf.mxu0
      %v580 = vpop.f32.mrf.mxu0
      %v581 = vadd.f32 0.0, %v580
      %v582 = vpop.f32.mrf.mxu0
      %583 = vmatprep.mubr.bf16.mxu0 0
      %584 = vmatmul.mubr.bf16.gmra.mxu0 %v494
      %v585 = vpop.f32.mrf.mxu0
      %v586 = vadd.f32 0.0, %v585
      %v587 = vpop.f32.mrf.mxu0
      %v588 = vpop.f32.mrf.mxu0
      %v589 = vadd.f32 0.0, %v588
      %v590 = vpop.f32.mrf.mxu0
      %591 = vmatprep.mubr.bf16.mxu0 0
      %592 = vmatmul.mubr.bf16.gmra.mxu0 %v497
      %v593 = vpop.f32.mrf.mxu0
      %v594 = vadd.f32 0.0, %v593
      %v595 = vpop.f32.mrf.mxu0
      %v596 = vpop.f32.mrf.mxu0
      %v597 = vadd.f32 0.0, %v596
      %v598 = vpop.f32.mrf.mxu0
      %599 = vdwg.mxu0
      %v600 = vld [vmem:[%s3] sm:$0xff]
      %v601 = vld [vmem:[%s3 + $0x8] sm:$0xff]
      %v602 = vld [vmem:[%s3 + $0x10] sm:$0xff]
      %v603 = vld [vmem:[%s3 + $0x18] sm:$0xff]
      %v604 = vld [vmem:[%s3 + $0x20] sm:$0xff]
      %v605 = vld [vmem:[%s3 + $0x28] sm:$0xff]
      %v606 = vld [vmem:[%s3 + $0x30] sm:$0xff]
      %v607 = vld [vmem:[%s3 + $0x38] sm:$0xff]
      %v608 = vld [vmem:[%s3 + $0x40] sm:$0xff]
      %v609 = vld [vmem:[%s3 + $0x48] sm:$0xff]
      %v610 = vld [vmem:[%s3 + $0x50] sm:$0xff]
      %v611 = vld [vmem:[%s3 + $0x58] sm:$0xff]
      %v612 = vld [vmem:[%s3 + $0x60] sm:$0xff]
      %v613 = vld [vmem:[%s3 + $0x68] sm:$0xff]
      %v614 = vld [vmem:[%s3 + $0x70] sm:$0xff]
      %v615 = vld [vmem:[%s3 + $0x78] sm:$0xff]
      %v616 = vld [vmem:[%s4] sm:$0xff]
      %v617 = vld [vmem:[%s4 + $0x8] sm:$0xff]
      %v618 = vld [vmem:[%s4 + $0x10] sm:$0xff]
      %v619 = vld [vmem:[%s4 + $0x18] sm:$0xff]
      %v620 = vld [vmem:[%s4 + $0x20] sm:$0xff]
      %v621 = vld [vmem:[%s4 + $0x28] sm:$0xff]
      %v622 = vld [vmem:[%s4 + $0x30] sm:$0xff]
      %v623 = vld [vmem:[%s4 + $0x38] sm:$0xff]
      %v624 = vld [vmem:[%s4 + $0x40] sm:$0xff]
      %v625 = vld [vmem:[%s4 + $0x48] sm:$0xff]
      %v626 = vld [vmem:[%s4 + $0x50] sm:$0xff]
      %v627 = vld [vmem:[%s4 + $0x58] sm:$0xff]
      %v628 = vld [vmem:[%s4 + $0x60] sm:$0xff]
      %v629 = vld [vmem:[%s4 + $0x68] sm:$0xff]
      %v630 = vld [vmem:[%s4 + $0x70] sm:$0xff]
      %v631 = vld [vmem:[%s4 + $0x78] sm:$0xff]
      %v632 = vld [vmem:[%s2] sm:$0x1]
      %vm633 = vcmask 778240
      %634 = vst.msk [vmem:[#allocation2] sm:$0x1] %vm633, 0.0
      %635 = vst.msk [vmem:[#allocation2 + $0x81] sm:$0x1] %vm633, 0.0
      %vm636 = vcmask 785408
      %637 = vst.msk [vmem:[#allocation2 + $0x1] sm:$0xff] %vm636, %v538
      %638 = vst.msk [vmem:[#allocation2 + $0x9] sm:$0xff] %vm636, %v541
      %639 = vst.msk [vmem:[#allocation2 + $0x11] sm:$0xff] %vm636, %v546
      %640 = vst.msk [vmem:[#allocation2 + $0x19] sm:$0xff] %vm636, %v549
      %641 = vst.msk [vmem:[#allocation2 + $0x21] sm:$0xff] %vm636, %v554
      %642 = vst.msk [vmem:[#allocation2 + $0x29] sm:$0xff] %vm636, %v557
      %643 = vst.msk [vmem:[#allocation2 + $0x31] sm:$0xff] %vm636, %v562
      %644 = vst.msk [vmem:[#allocation2 + $0x39] sm:$0xff] %vm636, %v565
      %645 = vst.msk [vmem:[#allocation2 + $0x41] sm:$0xff] %vm636, %v570
      %646 = vst.msk [vmem:[#allocation2 + $0x49] sm:$0xff] %vm636, %v573
      %647 = vst.msk [vmem:[#allocation2 + $0x51] sm:$0xff] %vm636, %v578
      %648 = vst.msk [vmem:[#allocation2 + $0x59] sm:$0xff] %vm636, %v581
      %649 = vst.msk [vmem:[#allocation2 + $0x61] sm:$0xff] %vm636, %v586
      %650 = vst.msk [vmem:[#allocation2 + $0x69] sm:$0xff] %vm636, %v589
      %651 = vst.msk [vmem:[#allocation2 + $0x71] sm:$0xff] %vm636, %v594
      %652 = vst.msk [vmem:[#allocation2 + $0x79] sm:$0xff] %vm636, %v597
      %v653 = vld [vmem:[#allocation2] sm:$0xff]
      %v654 = vld [vmem:[#allocation2 + $0x8] sm:$0xff]
      %v655 = vld [vmem:[#allocation2 + $0x10] sm:$0xff]
      %v656 = vld [vmem:[#allocation2 + $0x18] sm:$0xff]
      %v657 = vld [vmem:[#allocation2 + $0x20] sm:$0xff]
      %v658 = vld [vmem:[#allocation2 + $0x28] sm:$0xff]
      %v659 = vld [vmem:[#allocation2 + $0x30] sm:$0xff]
      %v660 = vld [vmem:[#allocation2 + $0x38] sm:$0xff]
      %v661 = vld [vmem:[#allocation2 + $0x40] sm:$0xff]
      %v662 = vld [vmem:[#allocation2 + $0x48] sm:$0xff]
      %v663 = vld [vmem:[#allocation2 + $0x50] sm:$0xff]
      %v664 = vld [vmem:[#allocation2 + $0x58] sm:$0xff]
      %v665 = vld [vmem:[#allocation2 + $0x60] sm:$0xff]
      %v666 = vld [vmem:[#allocation2 + $0x68] sm:$0xff]
      %v667 = vld [vmem:[#allocation2 + $0x70] sm:$0xff]
      %v668 = vld [vmem:[#allocation2 + $0x78] sm:$0xff]
      %v669 = vld [vmem:[#allocation2 + $0x1] sm:$0xff]
      %v670 = vld [vmem:[#allocation2 + $0x9] sm:$0xff]
      %v671 = vld [vmem:[#allocation2 + $0x11] sm:$0xff]
      %v672 = vld [vmem:[#allocation2 + $0x19] sm:$0xff]
      %v673 = vld [vmem:[#allocation2 + $0x21] sm:$0xff]
      %v674 = vld [vmem:[#allocation2 + $0x29] sm:$0xff]
      %v675 = vld [vmem:[#allocation2 + $0x31] sm:$0xff]
      %v676 = vld [vmem:[#allocation2 + $0x39] sm:$0xff]
      %v677 = vld [vmem:[#allocation2 + $0x41] sm:$0xff]
      %v678 = vld [vmem:[#allocation2 + $0x49] sm:$0xff]
      %v679 = vld [vmem:[#allocation2 + $0x51] sm:$0xff]
      %v680 = vld [vmem:[#allocation2 + $0x59] sm:$0xff]
      %v681 = vld [vmem:[#allocation2 + $0x61] sm:$0xff]
      %v682 = vld [vmem:[#allocation2 + $0x69] sm:$0xff]
      %v683 = vld [vmem:[#allocation2 + $0x71] sm:$0xff]
      %v684 = vld [vmem:[#allocation2 + $0x79] sm:$0xff]
      %v685 = vld [vmem:[#allocation2 + $0x2] sm:$0xff]
      %v686 = vld [vmem:[#allocation2 + $0xa] sm:$0xff]
      %v687 = vld [vmem:[#allocation2 + $0x12] sm:$0xff]
      %v688 = vld [vmem:[#allocation2 + $0x1a] sm:$0xff]
      %v689 = vld [vmem:[#allocation2 + $0x22] sm:$0xff]
      %v690 = vld [vmem:[#allocation2 + $0x2a] sm:$0xff]
      %v691 = vld [vmem:[#allocation2 + $0x32] sm:$0xff]
      %v692 = vld [vmem:[#allocation2 + $0x3a] sm:$0xff]
      %v693 = vld [vmem:[#allocation2 + $0x42] sm:$0xff]
      %v694 = vld [vmem:[#allocation2 + $0x4a] sm:$0xff]
      %v695 = vld [vmem:[#allocation2 + $0x52] sm:$0xff]
      %v696 = vld [vmem:[#allocation2 + $0x5a] sm:$0xff]
      %v697 = vld [vmem:[#allocation2 + $0x62] sm:$0xff]
      %v698 = vld [vmem:[#allocation2 + $0x6a] sm:$0xff]
      %v699 = vld [vmem:[#allocation2 + $0x72] sm:$0xff]
      %v700 = vld [vmem:[#allocation2 + $0x7a] sm:$0xff]
      %702 = vset.pattern.permute.xlu0 0
      %703 = vperm.xlu0 %702, %v600
      %v704 = vpop.permute.xlu0 %703
      %707 = vset.pattern.permute.xlu0 0
      %708 = vperm.xlu0 %707, %v601
      %v709 = vpop.permute.xlu0 %708
      %712 = vset.pattern.permute.xlu0 0
      %713 = vperm.xlu0 %712, %v602
      %v714 = vpop.permute.xlu0 %713
      %717 = vset.pattern.permute.xlu0 0
      %718 = vperm.xlu0 %717, %v603
      %v719 = vpop.permute.xlu0 %718
      %722 = vset.pattern.permute.xlu0 0
      %723 = vperm.xlu0 %722, %v604
      %v724 = vpop.permute.xlu0 %723
      %727 = vset.pattern.permute.xlu0 0
      %728 = vperm.xlu0 %727, %v605
      %v729 = vpop.permute.xlu0 %728
      %732 = vset.pattern.permute.xlu0 0
      %733 = vperm.xlu0 %732, %v606
      %v734 = vpop.permute.xlu0 %733
      %737 = vset.pattern.permute.xlu0 0
      %738 = vperm.xlu0 %737, %v607
      %v739 = vpop.permute.xlu0 %738
      %742 = vset.pattern.permute.xlu0 0
      %743 = vperm.xlu0 %742, %v608
      %v744 = vpop.permute.xlu0 %743
      %747 = vset.pattern.permute.xlu0 0
      %748 = vperm.xlu0 %747, %v609
      %v749 = vpop.permute.xlu0 %748
      %752 = vset.pattern.permute.xlu0 0
      %753 = vperm.xlu0 %752, %v610
      %v754 = vpop.permute.xlu0 %753
      %757 = vset.pattern.permute.xlu0 0
      %758 = vperm.xlu0 %757, %v611
      %v759 = vpop.permute.xlu0 %758
      %762 = vset.pattern.permute.xlu0 0
      %763 = vperm.xlu0 %762, %v612
      %v764 = vpop.permute.xlu0 %763
      %767 = vset.pattern.permute.xlu0 0
      %768 = vperm.xlu0 %767, %v613
      %v769 = vpop.permute.xlu0 %768
      %772 = vset.pattern.permute.xlu0 0
      %773 = vperm.xlu0 %772, %v614
      %v774 = vpop.permute.xlu0 %773
      %777 = vset.pattern.permute.xlu0 0
      %778 = vperm.xlu0 %777, %v615
      %v779 = vpop.permute.xlu0 %778
      %v781 = vmul.f32 %v704, %v653
      %v782 = vmul.f32 %v709, %v654
      %v783 = vmul.f32 %v714, %v655
      %v784 = vmul.f32 %v719, %v656
      %v785 = vmul.f32 %v724, %v657
      %v786 = vmul.f32 %v729, %v658
      %v787 = vmul.f32 %v734, %v659
      %v788 = vmul.f32 %v739, %v660
      %v789 = vmul.f32 %v744, %v661
      %v790 = vmul.f32 %v749, %v662
      %v791 = vmul.f32 %v754, %v663
      %v792 = vmul.f32 %v759, %v664
      %v793 = vmul.f32 %v764, %v665
      %v794 = vmul.f32 %v769, %v666
      %v795 = vmul.f32 %v774, %v667
      %v796 = vmul.f32 %v779, %v668
      %813 = vrot.lane.b32.xlu0 %v781, 32
      %v814 = vpop.permute.xlu0 %813
      %815 = vrot.lane.b32.xlu0 %v782, 32
      %v816 = vpop.permute.xlu0 %815
      %817 = vrot.lane.b32.xlu0 %v783, 32
      %v818 = vpop.permute.xlu0 %817
      %819 = vrot.lane.b32.xlu0 %v784, 32
      %v820 = vpop.permute.xlu0 %819
      %821 = vrot.lane.b32.xlu0 %v785, 32
      %v822 = vpop.permute.xlu0 %821
      %823 = vrot.lane.b32.xlu0 %v786, 32
      %v824 = vpop.permute.xlu0 %823
      %825 = vrot.lane.b32.xlu0 %v787, 32
      %v826 = vpop.permute.xlu0 %825
      %827 = vrot.lane.b32.xlu0 %v788, 32
      %v828 = vpop.permute.xlu0 %827
      %829 = vrot.lane.b32.xlu0 %v789, 32
      %v830 = vpop.permute.xlu0 %829
      %831 = vrot.lane.b32.xlu0 %v790, 32
      %v832 = vpop.permute.xlu0 %831
      %833 = vrot.lane.b32.xlu0 %v791, 32
      %v834 = vpop.permute.xlu0 %833
      %835 = vrot.lane.b32.xlu0 %v792, 32
      %v836 = vpop.permute.xlu0 %835
      %837 = vrot.lane.b32.xlu0 %v793, 32
      %v838 = vpop.permute.xlu0 %837
      %839 = vrot.lane.b32.xlu0 %v794, 32
      %v840 = vpop.permute.xlu0 %839
      %841 = vrot.lane.b32.xlu0 %v795, 32
      %v842 = vpop.permute.xlu0 %841
      %843 = vrot.lane.b32.xlu0 %v796, 32
      %v844 = vpop.permute.xlu0 %843
      %v861 = vadd.f32 %v669, %v814
      %v862 = vadd.f32 %v670, %v816
      %v863 = vadd.f32 %v671, %v818
      %v864 = vadd.f32 %v672, %v820
      %v865 = vadd.f32 %v673, %v822
      %v866 = vadd.f32 %v674, %v824
      %v867 = vadd.f32 %v675, %v826
      %v868 = vadd.f32 %v676, %v828
      %v869 = vadd.f32 %v677, %v830
      %v870 = vadd.f32 %v678, %v832
      %v871 = vadd.f32 %v679, %v834
      %v872 = vadd.f32 %v680, %v836
      %v873 = vadd.f32 %v681, %v838
      %v874 = vadd.f32 %v682, %v840
      %v875 = vadd.f32 %v683, %v842
      %v876 = vadd.f32 %v684, %v844
      %878 = vset.pattern.permute.xlu0 0
      %879 = vperm.xlu0 %878, %v616
      %v880 = vpop.permute.xlu0 %879
      %883 = vset.pattern.permute.xlu0 0
      %884 = vperm.xlu0 %883, %v617
      %v885 = vpop.permute.xlu0 %884
      %888 = vset.pattern.permute.xlu0 0
      %889 = vperm.xlu0 %888, %v618
      %v890 = vpop.permute.xlu0 %889
      %893 = vset.pattern.permute.xlu0 0
      %894 = vperm.xlu0 %893, %v619
      %v895 = vpop.permute.xlu0 %894
      %898 = vset.pattern.permute.xlu0 0
      %899 = vperm.xlu0 %898, %v620
      %v900 = vpop.permute.xlu0 %899
      %903 = vset.pattern.permute.xlu0 0
      %904 = vperm.xlu0 %903, %v621
      %v905 = vpop.permute.xlu0 %904
      %908 = vset.pattern.permute.xlu0 0
      %909 = vperm.xlu0 %908, %v622
      %v910 = vpop.permute.xlu0 %909
      %913 = vset.pattern.permute.xlu0 0
      %914 = vperm.xlu0 %913, %v623
      %v915 = vpop.permute.xlu0 %914
      %918 = vset.pattern.permute.xlu0 0
      %919 = vperm.xlu0 %918, %v624
      %v920 = vpop.permute.xlu0 %919
      %923 = vset.pattern.permute.xlu0 0
      %924 = vperm.xlu0 %923, %v625
      %v925 = vpop.permute.xlu0 %924
      %928 = vset.pattern.permute.xlu0 0
      %929 = vperm.xlu0 %928, %v626
      %v930 = vpop.permute.xlu0 %929
      %933 = vset.pattern.permute.xlu0 0
      %934 = vperm.xlu0 %933, %v627
      %v935 = vpop.permute.xlu0 %934
      %938 = vset.pattern.permute.xlu0 0
      %939 = vperm.xlu0 %938, %v628
      %v940 = vpop.permute.xlu0 %939
      %943 = vset.pattern.permute.xlu0 0
      %944 = vperm.xlu0 %943, %v629
      %v945 = vpop.permute.xlu0 %944
      %948 = vset.pattern.permute.xlu0 0
      %949 = vperm.xlu0 %948, %v630
      %v950 = vpop.permute.xlu0 %949
      %953 = vset.pattern.permute.xlu0 0
      %954 = vperm.xlu0 %953, %v631
      %v955 = vpop.permute.xlu0 %954
      %v957 = vmul.f32 %v880, %v685
      %v958 = vmul.f32 %v885, %v686
      %v959 = vmul.f32 %v890, %v687
      %v960 = vmul.f32 %v895, %v688
      %v961 = vmul.f32 %v900, %v689
      %v962 = vmul.f32 %v905, %v690
      %v963 = vmul.f32 %v910, %v691
      %v964 = vmul.f32 %v915, %v692
      %v965 = vmul.f32 %v920, %v693
      %v966 = vmul.f32 %v925, %v694
      %v967 = vmul.f32 %v930, %v695
      %v968 = vmul.f32 %v935, %v696
      %v969 = vmul.f32 %v940, %v697
      %v970 = vmul.f32 %v945, %v698
      %v971 = vmul.f32 %v950, %v699
      %v972 = vmul.f32 %v955, %v700
      %989 = vrot.lane.b32.xlu0 %v957, 96
      %v990 = vpop.permute.xlu0 %989
      %991 = vrot.lane.b32.xlu0 %v958, 96
      %v992 = vpop.permute.xlu0 %991
      %993 = vrot.lane.b32.xlu0 %v959, 96
      %v994 = vpop.permute.xlu0 %993
      %995 = vrot.lane.b32.xlu0 %v960, 96
      %v996 = vpop.permute.xlu0 %995
      %997 = vrot.lane.b32.xlu0 %v961, 96
      %v998 = vpop.permute.xlu0 %997
      %999 = vrot.lane.b32.xlu0 %v962, 96
      %v1000 = vpop.permute.xlu0 %999
      %1001 = vrot.lane.b32.xlu0 %v963, 96
      %v1002 = vpop.permute.xlu0 %1001
      %1003 = vrot.lane.b32.xlu0 %v964, 96
      %v1004 = vpop.permute.xlu0 %1003
      %1005 = vrot.lane.b32.xlu0 %v965, 96
      %v1006 = vpop.permute.xlu0 %1005
      %1007 = vrot.lane.b32.xlu0 %v966, 96
      %v1008 = vpop.permute.xlu0 %1007
      %1009 = vrot.lane.b32.xlu0 %v967, 96
      %v1010 = vpop.permute.xlu0 %1009
      %1011 = vrot.lane.b32.xlu0 %v968, 96
      %v1012 = vpop.permute.xlu0 %1011
      %1013 = vrot.lane.b32.xlu0 %v969, 96
      %v1014 = vpop.permute.xlu0 %1013
      %1015 = vrot.lane.b32.xlu0 %v970, 96
      %v1016 = vpop.permute.xlu0 %1015
      %1017 = vrot.lane.b32.xlu0 %v971, 96
      %v1018 = vpop.permute.xlu0 %1017
      %1019 = vrot.lane.b32.xlu0 %v972, 96
      %v1020 = vpop.permute.xlu0 %1019
      %v1037 = vadd.f32 %v861, %v990
      %v1038 = vadd.f32 %v862, %v992
      %v1039 = vadd.f32 %v863, %v994
      %v1040 = vadd.f32 %v864, %v996
      %v1041 = vadd.f32 %v865, %v998
      %v1042 = vadd.f32 %v866, %v1000
      %v1043 = vadd.f32 %v867, %v1002
      %v1044 = vadd.f32 %v868, %v1004
      %v1045 = vadd.f32 %v869, %v1006
      %v1046 = vadd.f32 %v870, %v1008
      %v1047 = vadd.f32 %v871, %v1010
      %v1048 = vadd.f32 %v872, %v1012
      %v1049 = vadd.f32 %v873, %v1014
      %v1050 = vadd.f32 %v874, %v1016
      %v1051 = vadd.f32 %v875, %v1018
      %v1052 = vadd.f32 %v876, %v1020
      %v1054 = vlaneseq
      %v1055 = vshrl.u32 %v1054, 7
      %v1056 = vsub.s32 0, %v1055
      %v1057 = vrot.slane %v632, %v1056
      %1058 = vrot.lane.b32.xlu0 %v1057, 32
      %v1059 = vpop.permute.xlu0 %1058
      %v1061 = vadd.f32 %v1037, %v1059
      %v1062 = vadd.f32 %v1038, %v1059
      %v1063 = vadd.f32 %v1039, %v1059
      %v1064 = vadd.f32 %v1040, %v1059
      %v1065 = vadd.f32 %v1041, %v1059
      %v1066 = vadd.f32 %v1042, %v1059
      %v1067 = vadd.f32 %v1043, %v1059
      %v1068 = vadd.f32 %v1044, %v1059
      %v1069 = vadd.f32 %v1045, %v1059
      %v1070 = vadd.f32 %v1046, %v1059
      %v1071 = vadd.f32 %v1047, %v1059
      %v1072 = vadd.f32 %v1048, %v1059
      %v1073 = vadd.f32 %v1049, %v1059
      %v1074 = vadd.f32 %v1050, %v1059
      %v1075 = vadd.f32 %v1051, %v1059
      %v1076 = vadd.f32 %v1052, %v1059
      %vm1077 = vcmp.gt.f32.partialorder %v1061, 0.0
      %vm1078 = vcmp.gt.f32.partialorder %v1062, 0.0
      %vm1079 = vcmp.gt.f32.partialorder %v1063, 0.0
      %vm1080 = vcmp.gt.f32.partialorder %v1064, 0.0
      %vm1081 = vcmp.gt.f32.partialorder %v1065, 0.0
      %vm1082 = vcmp.gt.f32.partialorder %v1066, 0.0
      %vm1083 = vcmp.gt.f32.partialorder %v1067, 0.0
      %vm1084 = vcmp.gt.f32.partialorder %v1068, 0.0
      %vm1085 = vcmp.gt.f32.partialorder %v1069, 0.0
      %vm1086 = vcmp.gt.f32.partialorder %v1070, 0.0
      %vm1087 = vcmp.gt.f32.partialorder %v1071, 0.0
      %vm1088 = vcmp.gt.f32.partialorder %v1072, 0.0
      %vm1089 = vcmp.gt.f32.partialorder %v1073, 0.0
      %vm1090 = vcmp.gt.f32.partialorder %v1074, 0.0
      %vm1091 = vcmp.gt.f32.partialorder %v1075, 0.0
      %vm1092 = vcmp.gt.f32.partialorder %v1076, 0.0
      %v1093 = vmul.f32 %v1061, 0.2
      %v1094 = vmul.f32 %v1062, 0.2
      %v1095 = vmul.f32 %v1063, 0.2
      %v1096 = vmul.f32 %v1064, 0.2
      %v1097 = vmul.f32 %v1065, 0.2
      %v1098 = vmul.f32 %v1066, 0.2
      %v1099 = vmul.f32 %v1067, 0.2
      %v1100 = vmul.f32 %v1068, 0.2
      %v1101 = vmul.f32 %v1069, 0.2
      %v1102 = vmul.f32 %v1070, 0.2
      %v1103 = vmul.f32 %v1071, 0.2
      %v1104 = vmul.f32 %v1072, 0.2
      %v1105 = vmul.f32 %v1073, 0.2
      %v1106 = vmul.f32 %v1074, 0.2
      %v1107 = vmul.f32 %v1075, 0.2
      %v1108 = vmul.f32 %v1076, 0.2
      %v1109 = vsel %vm1077, %v1061, %v1093
      %v1110 = vsel %vm1078, %v1062, %v1094
      %v1111 = vsel %vm1079, %v1063, %v1095
      %v1112 = vsel %vm1080, %v1064, %v1096
      %v1113 = vsel %vm1081, %v1065, %v1097
      %v1114 = vsel %vm1082, %v1066, %v1098
      %v1115 = vsel %vm1083, %v1067, %v1099
      %v1116 = vsel %vm1084, %v1068, %v1100
      %v1117 = vsel %vm1085, %v1069, %v1101
      %v1118 = vsel %vm1086, %v1070, %v1102
      %v1119 = vsel %vm1087, %v1071, %v1103
      %v1120 = vsel %vm1088, %v1072, %v1104
      %v1121 = vsel %vm1089, %v1073, %v1105
      %v1122 = vsel %vm1090, %v1074, %v1106
      %v1123 = vsel %vm1091, %v1075, %v1107
      %v1124 = vsel %vm1092, %v1076, %v1108
      %1141 = vrot.lane.b32.xlu0 %v1109, 96
      %v1142 = vpop.permute.xlu0 %1141
      %1143 = vrot.lane.b32.xlu0 %v1110, 96
      %v1144 = vpop.permute.xlu0 %1143
      %1145 = vrot.lane.b32.xlu0 %v1111, 96
      %v1146 = vpop.permute.xlu0 %1145
      %1147 = vrot.lane.b32.xlu0 %v1112, 96
      %v1148 = vpop.permute.xlu0 %1147
      %1149 = vrot.lane.b32.xlu0 %v1113, 96
      %v1150 = vpop.permute.xlu0 %1149
      %1151 = vrot.lane.b32.xlu0 %v1114, 96
      %v1152 = vpop.permute.xlu0 %1151
      %1153 = vrot.lane.b32.xlu0 %v1115, 96
      %v1154 = vpop.permute.xlu0 %1153
      %1155 = vrot.lane.b32.xlu0 %v1116, 96
      %v1156 = vpop.permute.xlu0 %1155
      %1157 = vrot.lane.b32.xlu0 %v1117, 96
      %v1158 = vpop.permute.xlu0 %1157
      %1159 = vrot.lane.b32.xlu0 %v1118, 96
      %v1160 = vpop.permute.xlu0 %1159
      %1161 = vrot.lane.b32.xlu0 %v1119, 96
      %v1162 = vpop.permute.xlu0 %1161
      %1163 = vrot.lane.b32.xlu0 %v1120, 96
      %v1164 = vpop.permute.xlu0 %1163
      %1165 = vrot.lane.b32.xlu0 %v1121, 96
      %v1166 = vpop.permute.xlu0 %1165
      %1167 = vrot.lane.b32.xlu0 %v1122, 96
      %v1168 = vpop.permute.xlu0 %1167
      %1169 = vrot.lane.b32.xlu0 %v1123, 96
      %v1170 = vpop.permute.xlu0 %1169
      %1171 = vrot.lane.b32.xlu0 %v1124, 96
      %v1172 = vpop.permute.xlu0 %1171
      %vm1189 = vcmask 261120
      %1190 = vst.msk [vmem:[#allocation3] sm:$0xff] %vm1189, %v1142
      %1191 = vst.msk [vmem:[#allocation3 + $0x8] sm:$0xff] %vm1189, %v1144
      %1192 = vst.msk [vmem:[#allocation3 + $0x10] sm:$0xff] %vm1189, %v1146
      %1193 = vst.msk [vmem:[#allocation3 + $0x18] sm:$0xff] %vm1189, %v1148
      %1194 = vst.msk [vmem:[#allocation3 + $0x20] sm:$0xff] %vm1189, %v1150
      %1195 = vst.msk [vmem:[#allocation3 + $0x28] sm:$0xff] %vm1189, %v1152
      %1196 = vst.msk [vmem:[#allocation3 + $0x30] sm:$0xff] %vm1189, %v1154
      %1197 = vst.msk [vmem:[#allocation3 + $0x38] sm:$0xff] %vm1189, %v1156
      %1198 = vst.msk [vmem:[#allocation3 + $0x40] sm:$0xff] %vm1189, %v1158
      %1199 = vst.msk [vmem:[#allocation3 + $0x48] sm:$0xff] %vm1189, %v1160
      %1200 = vst.msk [vmem:[#allocation3 + $0x50] sm:$0xff] %vm1189, %v1162
      %1201 = vst.msk [vmem:[#allocation3 + $0x58] sm:$0xff] %vm1189, %v1164
      %1202 = vst.msk [vmem:[#allocation3 + $0x60] sm:$0xff] %vm1189, %v1166
      %1203 = vst.msk [vmem:[#allocation3 + $0x68] sm:$0xff] %vm1189, %v1168
      %1204 = vst.msk [vmem:[#allocation3 + $0x70] sm:$0xff] %vm1189, %v1170
      %1205 = vst.msk [vmem:[#allocation3 + $0x78] sm:$0xff] %vm1189, %v1172
      %v1206 = vld [vmem:[#allocation3] ss:$2 sm:$0xff]
      %s1207 = scalar_lea.vmem [#allocation3], 16
      %v1208 = vld [vmem:[%s1207] ss:$2 sm:$0xff]
      %s1209 = scalar_lea.vmem [#allocation3], 32
      %v1210 = vld [vmem:[%s1209] ss:$2 sm:$0xff]
      %s1211 = scalar_lea.vmem [#allocation3], 48
      %v1212 = vld [vmem:[%s1211] ss:$2 sm:$0xff]
      %s1213 = scalar_lea.vmem [#allocation3], 64
      %v1214 = vld [vmem:[%s1213] ss:$2 sm:$0xff]
      %s1215 = scalar_lea.vmem [#allocation3], 80
      %v1216 = vld [vmem:[%s1215] ss:$2 sm:$0xff]
      %s1217 = scalar_lea.vmem [#allocation3], 96
      %v1218 = vld [vmem:[%s1217] ss:$2 sm:$0xff]
      %s1219 = scalar_lea.vmem [#allocation3], 112
      %v1220 = vld [vmem:[%s1219] ss:$2 sm:$0xff]
      %s1221 = scalar_lea.vmem [#allocation3], 1
      %v1222 = vld [vmem:[%s1221] ss:$2 sm:$0xff]
      %s1223 = scalar_lea.vmem [#allocation3], 17
      %v1224 = vld [vmem:[%s1223] ss:$2 sm:$0xff]
      %s1225 = scalar_lea.vmem [#allocation3], 33
      %v1226 = vld [vmem:[%s1225] ss:$2 sm:$0xff]
      %s1227 = scalar_lea.vmem [#allocation3], 49
      %v1228 = vld [vmem:[%s1227] ss:$2 sm:$0xff]
      %s1229 = scalar_lea.vmem [#allocation3], 65
      %v1230 = vld [vmem:[%s1229] ss:$2 sm:$0xff]
      %s1231 = scalar_lea.vmem [#allocation3], 81
      %v1232 = vld [vmem:[%s1231] ss:$2 sm:$0xff]
      %s1233 = scalar_lea.vmem [#allocation3], 97
      %v1234 = vld [vmem:[%s1233] ss:$2 sm:$0xff]
      %s1235 = scalar_lea.vmem [#allocation3], 113
      %v1236 = vld [vmem:[%s1235] ss:$2 sm:$0xff]
      %v1237 = vmax.f32 %v1206, %v1222
      %v1238 = vmax.f32 %v1208, %v1224
      %v1239 = vmax.f32 %v1210, %v1226
      %v1240 = vmax.f32 %v1212, %v1228
      %v1241 = vmax.f32 %v1214, %v1230
      %v1242 = vmax.f32 %v1216, %v1232
      %v1243 = vmax.f32 %v1218, %v1234
      %v1244 = vmax.f32 %v1220, %v1236
      %v1245 = vpack.c.bf16 %v1238, %v1237
      %v1246 = vpack.c.bf16 %v1240, %v1239
      %v1247 = vpack.c.bf16 %v1242, %v1241
      %v1248 = vpack.c.bf16 %v1244, %v1243
      %v1249 = vld [vmem:[%s5] sm:$0xff]
      %v1250 = vld [vmem:[%s5 + $0x8] sm:$0xff]
      %v1251 = vld [vmem:[%s5 + $0x10] sm:$0xff]
      %v1252 = vld [vmem:[%s5 + $0x18] sm:$0xff]
      %v1257 = vunpack.c.l.b16 %v1249
      %v1258 = vunpack.c.h.b16 %v1249
      %v1259 = vunpack.c.l.b16 %v1250
      %v1260 = vunpack.c.h.b16 %v1250
      %v1261 = vunpack.c.l.b16 %v1251
      %v1262 = vunpack.c.h.b16 %v1251
      %v1263 = vunpack.c.l.b16 %v1252
      %v1264 = vunpack.c.h.b16 %v1252
      %v1265 = vpack.c.b16 %v1259, %v1257
      %v1266 = vpack.c.b16 %v1260, %v1258
      %v1267 = vpack.c.b16 %v1263, %v1261
      %v1268 = vpack.c.b16 %v1264, %v1262
      %v1274 = vsel %vm1189, %v1245, 0
      %v1277 = vsel %vm1189, %v1246, 0
      %v1280 = vsel %vm1189, %v1247, 0
      %v1283 = vsel %vm1189, %v1248, 0
      %1285 = vmatprep.subr.bf16.mxu0 0
      %1286 = vmatpush1.bf16.msra.mxu0 0
      %1287 = vmatprep.subr.bf16.mxu0 0
      %1288 = vmatpush1.bf16.msra.mxu0 0
      %1289 = vmatprep.subr.bf16.mxu0 0
      %1290 = vmatpush1.bf16.msra.mxu0 0
      %1291 = vmatprep.subr.bf16.mxu0 0
      %1292 = vmatpush1.bf16.msra.mxu0 0
      %1293 = vmatprep.subr.bf16.mxu0 0
      %1294 = vmatpush1.bf16.msra.mxu0 0
      %1295 = vmatprep.subr.bf16.mxu0 0
      %1296 = vmatpush1.bf16.msra.mxu0 0
      %1297 = vmatprep.subr.bf16.mxu0 %v1268
      %1298 = vmatpush1.bf16.msra.mxu0 %v1267
      %1299 = vmatprep.subr.bf16.mxu0 %v1266
      %1300 = vmatpush1.bf16.msra.mxu0 %v1265
      %1301 = vmatprep.subr.bf16.mxu0 0
      %1302 = vmatpush2.bf16.msra.mxu0 0
      %1303 = vmatprep.subr.bf16.mxu0 0
      %1304 = vmatpush2.bf16.msra.mxu0 0
      %1305 = vmatprep.subr.bf16.mxu0 0
      %1306 = vmatpush2.bf16.msra.mxu0 0
      %1307 = vmatprep.subr.bf16.mxu0 0
      %1308 = vmatpush2.bf16.msra.mxu0 0
      %1309 = vmatprep.subr.bf16.mxu0 0
      %1310 = vmatpush2.bf16.msra.mxu0 0
      %1311 = vmatprep.subr.bf16.mxu0 0
      %1312 = vmatpush2.bf16.msra.mxu0 0
      %1313 = vmatprep.subr.bf16.mxu0 0
      %1314 = vmatpush2.bf16.msra.mxu0 0
      %1315 = vmatprep.subr.bf16.mxu0 0
      %1316 = vmatpush2.bf16.msra.mxu0 0
      %1317 = vmatprep.mubr.bf16.mxu0 0
      %1318 = vmatmul.mubr.bf16.gmra.mxu0 %v1274
      %v1319 = vpop.f32.mrf.mxu0
      %v1320 = vadd.f32 0.0, %v1319
      %v1321 = vpop.f32.mrf.mxu0
      %v1322 = vadd.f32 0.0, %v1321
      %v1323 = vpop.f32.mrf.mxu0
      %v1324 = vadd.f32 0.0, %v1323
      %v1325 = vpop.f32.mrf.mxu0
      %v1326 = vadd.f32 0.0, %v1325
      %1327 = vmatprep.mubr.bf16.mxu0 0
      %1328 = vmatmul.mubr.bf16.gmra.mxu0 %v1277
      %v1329 = vpop.f32.mrf.mxu0
      %v1330 = vadd.f32 0.0, %v1329
      %v1331 = vpop.f32.mrf.mxu0
      %v1332 = vadd.f32 0.0, %v1331
      %v1333 = vpop.f32.mrf.mxu0
      %v1334 = vadd.f32 0.0, %v1333
      %v1335 = vpop.f32.mrf.mxu0
      %v1336 = vadd.f32 0.0, %v1335
      %1337 = vmatprep.mubr.bf16.mxu0 0
      %1338 = vmatmul.mubr.bf16.gmra.mxu0 %v1280
      %v1339 = vpop.f32.mrf.mxu0
      %v1340 = vadd.f32 0.0, %v1339
      %v1341 = vpop.f32.mrf.mxu0
      %v1342 = vadd.f32 0.0, %v1341
      %v1343 = vpop.f32.mrf.mxu0
      %v1344 = vadd.f32 0.0, %v1343
      %v1345 = vpop.f32.mrf.mxu0
      %v1346 = vadd.f32 0.0, %v1345
      %1347 = vmatprep.mubr.bf16.mxu0 0
      %1348 = vmatmul.mubr.bf16.gmra.mxu0 %v1283
      %v1349 = vpop.f32.mrf.mxu0
      %v1350 = vadd.f32 0.0, %v1349
      %v1351 = vpop.f32.mrf.mxu0
      %v1352 = vadd.f32 0.0, %v1351
      %v1353 = vpop.f32.mrf.mxu0
      %v1354 = vadd.f32 0.0, %v1353
      %v1355 = vpop.f32.mrf.mxu0
      %v1356 = vadd.f32 0.0, %v1355
      %1357 = vdwg.mxu0
      %v1358 = vld [vmem:[%s7] sm:$0xff]
      %v1359 = vld [vmem:[%s7 + $0x8] sm:$0xff]
      %v1360 = vld [vmem:[%s7 + $0x10] sm:$0xff]
      %v1361 = vld [vmem:[%s7 + $0x18] sm:$0xff]
      %v1362 = vld [vmem:[%s7 + $0x20] sm:$0xff]
      %v1363 = vld [vmem:[%s7 + $0x28] sm:$0xff]
      %v1364 = vld [vmem:[%s7 + $0x30] sm:$0xff]
      %v1365 = vld [vmem:[%s7 + $0x38] sm:$0xff]
      %v1366 = vld [vmem:[%s8] sm:$0xff]
      %v1367 = vld [vmem:[%s8 + $0x8] sm:$0xff]
      %v1368 = vld [vmem:[%s8 + $0x10] sm:$0xff]
      %v1369 = vld [vmem:[%s8 + $0x18] sm:$0xff]
      %v1370 = vld [vmem:[%s8 + $0x20] sm:$0xff]
      %v1371 = vld [vmem:[%s8 + $0x28] sm:$0xff]
      %v1372 = vld [vmem:[%s8 + $0x30] sm:$0xff]
      %v1373 = vld [vmem:[%s8 + $0x38] sm:$0xff]
      %v1374 = vld [vmem:[%s6] sm:$0x1]
      %v1375 = vlaneseq
      %vm1376 = vcmp.ge.s32.totalorder %v1375, 0
      %vm1377 = vcmp.lt.s32.totalorder %v1375, 192
      %vm1378 = vmand %vm1376, %vm1377
      %1379 = vst.msk [vmem:[#allocation4] ss:$8 sm:$0x3] %vm1378, 0.0
      %1380 = vst.msk [vmem:[#allocation4] ss:$8 sm:$0x0] %vm1378, 0.0
      %s1381 = scalar_lea.vmem [#allocation4], 129
      %1382 = vst.msk [vmem:[%s1381] ss:$8 sm:$0x3] %vm1378, 0.0
      %1383 = vst.msk [vmem:[%s1381] ss:$8 sm:$0x0] %vm1378, 0.0
      %vm1400 = vcmask 1040384
      %v1401 = vrot.slane %v1320, 7
      %v1402 = vrot.slane %v1322, 7
      %v1403 = vrot.slane %v1324, 7
      %v1404 = vsel %vm1400, %v1401, %v1403
      %v1405 = vrot.slane %v1326, 7
      %v1406 = vsel %vm1400, %v1402, %v1405
      %v1407 = vrot.slane %v1330, 7
      %v1408 = vsel %vm1400, %v1403, %v1407
      %v1409 = vrot.slane %v1332, 7
      %v1410 = vsel %vm1400, %v1405, %v1409
      %v1411 = vrot.slane %v1334, 7
      %v1412 = vsel %vm1400, %v1407, %v1411
      %v1413 = vrot.slane %v1336, 7
      %v1414 = vsel %vm1400, %v1409, %v1413
      %v1415 = vrot.slane %v1340, 7
      %v1416 = vsel %vm1400, %v1411, %v1415
      %v1417 = vrot.slane %v1342, 7
      %v1418 = vsel %vm1400, %v1413, %v1417
      %v1419 = vrot.slane %v1344, 7
      %v1420 = vsel %vm1400, %v1415, %v1419
      %v1421 = vrot.slane %v1346, 7
      %v1422 = vsel %vm1400, %v1417, %v1421
      %v1423 = vrot.slane %v1350, 7
      %v1424 = vsel %vm1400, %v1419, %v1423
      %v1425 = vrot.slane %v1352, 7
      %v1426 = vsel %vm1400, %v1421, %v1425
      %v1427 = vrot.slane %v1354, 7
      %v1428 = vsel %vm1400, %v1423, %v1427
      %v1429 = vrot.slane %v1356, 7
      %v1430 = vsel %vm1400, %v1425, %v1429
      %1449 = vst [vmem:[#allocation4] sm:$0xfe] %v1401
      %vm1450 = vcmask 523265
      %1451 = vst.msk [vmem:[#allocation4 + $0x8] sm:$0xfe] %vm1450, %v1402
      %1452 = vst [vmem:[#allocation4 + $0x10] sm:$0xff] %v1404
      %vm1453 = vcmask 523264
      %1454 = vst.msk [vmem:[#allocation4 + $0x18] sm:$0xff] %vm1453, %v1406
      %1455 = vst [vmem:[#allocation4 + $0x20] sm:$0xff] %v1408
      %1456 = vst.msk [vmem:[#allocation4 + $0x28] sm:$0xff] %vm1453, %v1410
      %1457 = vst [vmem:[#allocation4 + $0x30] sm:$0xff] %v1412
      %1458 = vst.msk [vmem:[#allocation4 + $0x38] sm:$0xff] %vm1453, %v1414
      %1459 = vst [vmem:[#allocation4 + $0x40] sm:$0xff] %v1416
      %1460 = vst.msk [vmem:[#allocation4 + $0x48] sm:$0xff] %vm1453, %v1418
      %1461 = vst [vmem:[#allocation4 + $0x50] sm:$0xff] %v1420
      %1462 = vst.msk [vmem:[#allocation4 + $0x58] sm:$0xff] %vm1453, %v1422
      %1463 = vst [vmem:[#allocation4 + $0x60] sm:$0xff] %v1424
      %1464 = vst.msk [vmem:[#allocation4 + $0x68] sm:$0xff] %vm1453, %v1426
      %1465 = vst [vmem:[#allocation4 + $0x70] sm:$0xff] %v1428
      %1466 = vst.msk [vmem:[#allocation4 + $0x78] sm:$0xff] %vm1453, %v1430
      %1467 = vst [vmem:[#allocation4 + $0x80] sm:$0x1] %v1427
      %vm1468 = vcmask 516096
      %1469 = vst.msk [vmem:[#allocation4 + $0x88] sm:$0x1] %vm1468, %v1429
      %v1470 = vld [vmem:[#allocation4] sm:$0xff]
      %v1471 = vld [vmem:[#allocation4 + $0x10] sm:$0xff]
      %v1472 = vld [vmem:[#allocation4 + $0x20] sm:$0xff]
      %v1473 = vld [vmem:[#allocation4 + $0x30] sm:$0xff]
      %v1474 = vld [vmem:[#allocation4 + $0x40] sm:$0xff]
      %v1475 = vld [vmem:[#allocation4 + $0x50] sm:$0xff]
      %v1476 = vld [vmem:[#allocation4 + $0x60] sm:$0xff]
      %v1477 = vld [vmem:[#allocation4 + $0x70] sm:$0xff]
      %v1478 = vld [vmem:[#allocation4] sm:$0xfe]
      %v1479 = vld [vmem:[#allocation4 + $0x80] sm:$0x1]
      %v1480 = vld [vmem:[#allocation4 + $0x8] sm:$0xfc]
      %v1481 = vld [vmem:[#allocation4 + $0x18] sm:$0xff]
      %v1482 = vld [vmem:[#allocation4 + $0x28] sm:$0xff]
      %v1483 = vld [vmem:[#allocation4 + $0x38] sm:$0xff]
      %v1484 = vld [vmem:[#allocation4 + $0x48] sm:$0xff]
      %v1485 = vld [vmem:[#allocation4 + $0x58] sm:$0xff]
      %v1486 = vld [vmem:[#allocation4 + $0x68] sm:$0xff]
      %v1487 = vld [vmem:[#allocation4 + $0x78] sm:$0xff]
      %v1488 = vld [vmem:[#allocation4 + $0x88] sm:$0x3]
      %1490 = vset.pattern.permute.xlu0 0
      %1491 = vperm.xlu0 %1490, %v1358
      %v1492 = vpop.permute.xlu0 %1491
      %1495 = vset.pattern.permute.xlu0 0
      %1496 = vperm.xlu0 %1495, %v1359
      %v1497 = vpop.permute.xlu0 %1496
      %1500 = vset.pattern.permute.xlu0 0
      %1501 = vperm.xlu0 %1500, %v1360
      %v1502 = vpop.permute.xlu0 %1501
      %1505 = vset.pattern.permute.xlu0 0
      %1506 = vperm.xlu0 %1505, %v1361
      %v1507 = vpop.permute.xlu0 %1506
      %1510 = vset.pattern.permute.xlu0 0
      %1511 = vperm.xlu0 %1510, %v1362
      %v1512 = vpop.permute.xlu0 %1511
      %1515 = vset.pattern.permute.xlu0 0
      %1516 = vperm.xlu0 %1515, %v1363
      %v1517 = vpop.permute.xlu0 %1516
      %1520 = vset.pattern.permute.xlu0 0
      %1521 = vperm.xlu0 %1520, %v1364
      %v1522 = vpop.permute.xlu0 %1521
      %1525 = vset.pattern.permute.xlu0 0
      %1526 = vperm.xlu0 %1525, %v1365
      %v1527 = vpop.permute.xlu0 %1526
      %v1529 = vmul.f32 %v1492, %v1470
      %v1530 = vmul.f32 %v1497, %v1471
      %v1531 = vmul.f32 %v1502, %v1472
      %v1532 = vmul.f32 %v1507, %v1473
      %v1533 = vmul.f32 %v1512, %v1474
      %v1534 = vmul.f32 %v1517, %v1475
      %v1535 = vmul.f32 %v1522, %v1476
      %v1536 = vmul.f32 %v1527, %v1477
      %v1545 = vrot.slane %v1529, 7
      %v1546 = vrot.slane %v1530, 7
      %v1547 = vsel %vm1400, %v1545, %v1546
      %v1548 = vrot.slane %v1531, 7
      %v1549 = vsel %vm1400, %v1546, %v1548
      %v1550 = vrot.slane %v1532, 7
      %v1551 = vsel %vm1400, %v1548, %v1550
      %v1552 = vrot.slane %v1533, 7
      %v1553 = vsel %vm1400, %v1550, %v1552
      %v1554 = vrot.slane %v1534, 7
      %v1555 = vsel %vm1400, %v1552, %v1554
      %v1556 = vrot.slane %v1535, 7
      %v1557 = vsel %vm1400, %v1554, %v1556
      %v1558 = vrot.slane %v1536, 7
      %v1559 = vsel %vm1400, %v1556, %v1558
      %1560 = vrot.lane.b32.xlu0 %v1545, 64
      %v1561 = vpop.permute.xlu0 %1560
      %1562 = vrot.lane.b32.xlu0 %v1547, 64
      %v1563 = vpop.permute.xlu0 %1562
      %1564 = vrot.lane.b32.xlu0 %v1549, 64
      %v1565 = vpop.permute.xlu0 %1564
      %1566 = vrot.lane.b32.xlu0 %v1551, 64
      %v1567 = vpop.permute.xlu0 %1566
      %1568 = vrot.lane.b32.xlu0 %v1553, 64
      %v1569 = vpop.permute.xlu0 %1568
      %1570 = vrot.lane.b32.xlu0 %v1555, 64
      %v1571 = vpop.permute.xlu0 %1570
      %1572 = vrot.lane.b32.xlu0 %v1557, 64
      %v1573 = vpop.permute.xlu0 %1572
      %1574 = vrot.lane.b32.xlu0 %v1559, 64
      %v1575 = vpop.permute.xlu0 %1574
      %1576 = vrot.lane.b32.xlu0 %v1558, 64
      %v1577 = vpop.permute.xlu0 %1576
      %v1587 = vadd.f32 %v1478, %v1561
      %v1588 = vadd.f32 %v1471, %v1563
      %v1589 = vadd.f32 %v1472, %v1565
      %v1590 = vadd.f32 %v1473, %v1567
      %v1591 = vadd.f32 %v1474, %v1569
      %v1592 = vadd.f32 %v1475, %v1571
      %v1593 = vadd.f32 %v1476, %v1573
      %v1594 = vadd.f32 %v1477, %v1575
      %v1595 = vadd.f32 %v1479, %v1577
      %1597 = vset.pattern.permute.xlu0 0
      %1598 = vperm.xlu0 %1597, %v1366
      %v1599 = vpop.permute.xlu0 %1598
      %1602 = vset.pattern.permute.xlu0 0
      %1603 = vperm.xlu0 %1602, %v1367
      %v1604 = vpop.permute.xlu0 %1603
      %1607 = vset.pattern.permute.xlu0 0
      %1608 = vperm.xlu0 %1607, %v1368
      %v1609 = vpop.permute.xlu0 %1608
      %1612 = vset.pattern.permute.xlu0 0
      %1613 = vperm.xlu0 %1612, %v1369
      %v1614 = vpop.permute.xlu0 %1613
      %1617 = vset.pattern.permute.xlu0 0
      %1618 = vperm.xlu0 %1617, %v1370
      %v1619 = vpop.permute.xlu0 %1618
      %1622 = vset.pattern.permute.xlu0 0
      %1623 = vperm.xlu0 %1622, %v1371
      %v1624 = vpop.permute.xlu0 %1623
      %1627 = vset.pattern.permute.xlu0 0
      %1628 = vperm.xlu0 %1627, %v1372
      %v1629 = vpop.permute.xlu0 %1628
      %1632 = vset.pattern.permute.xlu0 0
      %1633 = vperm.xlu0 %1632, %v1373
      %v1634 = vpop.permute.xlu0 %1633
      %vm1645 = vcmask 1045504
      %v1646 = vrot.slane %v1480, 2
      %v1647 = vrot.slane %v1481, 2
      %v1648 = vsel %vm1645, %v1646, %v1647
      %v1649 = vrot.slane %v1482, 2
      %v1650 = vsel %vm1645, %v1647, %v1649
      %v1651 = vrot.slane %v1483, 2
      %v1652 = vsel %vm1645, %v1649, %v1651
      %v1653 = vrot.slane %v1484, 2
      %v1654 = vsel %vm1645, %v1651, %v1653
      %v1655 = vrot.slane %v1485, 2
      %v1656 = vsel %vm1645, %v1653, %v1655
      %v1657 = vrot.slane %v1486, 2
      %v1658 = vsel %vm1645, %v1655, %v1657
      %v1659 = vrot.slane %v1487, 2
      %v1660 = vsel %vm1645, %v1657, %v1659
      %v1661 = vrot.slane %v1488, 2
      %v1662 = vsel %vm1645, %v1659, %v1661
      %v1671 = vmul.f32 %v1599, %v1648
      %v1672 = vmul.f32 %v1604, %v1650
      %v1673 = vmul.f32 %v1609, %v1652
      %v1674 = vmul.f32 %v1614, %v1654
      %v1675 = vmul.f32 %v1619, %v1656
      %v1676 = vmul.f32 %v1624, %v1658
      %v1677 = vmul.f32 %v1629, %v1660
      %v1678 = vmul.f32 %v1634, %v1662
      %v1687 = vrot.slane %v1671, 7
      %v1688 = vrot.slane %v1672, 7
      %v1689 = vsel %vm1400, %v1687, %v1688
      %v1690 = vrot.slane %v1673, 7
      %v1691 = vsel %vm1400, %v1688, %v1690
      %v1692 = vrot.slane %v1674, 7
      %v1693 = vsel %vm1400, %v1690, %v1692
      %v1694 = vrot.slane %v1675, 7
      %v1695 = vsel %vm1400, %v1692, %v1694
      %v1696 = vrot.slane %v1676, 7
      %v1697 = vsel %vm1400, %v1694, %v1696
      %v1698 = vrot.slane %v1677, 7
      %v1699 = vsel %vm1400, %v1696, %v1698
      %v1700 = vrot.slane %v1678, 7
      %v1701 = vsel %vm1400, %v1698, %v1700
      %1702 = vrot.lane.b32.xlu0 %v1687, 64
      %v1703 = vpop.permute.xlu0 %1702
      %1704 = vrot.lane.b32.xlu0 %v1689, 64
      %v1705 = vpop.permute.xlu0 %1704
      %1706 = vrot.lane.b32.xlu0 %v1691, 64
      %v1707 = vpop.permute.xlu0 %1706
      %1708 = vrot.lane.b32.xlu0 %v1693, 64
      %v1709 = vpop.permute.xlu0 %1708
      %1710 = vrot.lane.b32.xlu0 %v1695, 64
      %v1711 = vpop.permute.xlu0 %1710
      %1712 = vrot.lane.b32.xlu0 %v1697, 64
      %v1713 = vpop.permute.xlu0 %1712
      %1714 = vrot.lane.b32.xlu0 %v1699, 64
      %v1715 = vpop.permute.xlu0 %1714
      %1716 = vrot.lane.b32.xlu0 %v1701, 64
      %v1717 = vpop.permute.xlu0 %1716
      %1718 = vrot.lane.b32.xlu0 %v1700, 64
      %v1719 = vpop.permute.xlu0 %1718
      %v1729 = vadd.f32 %v1587, %v1703
      %v1730 = vadd.f32 %v1588, %v1705
      %v1731 = vadd.f32 %v1589, %v1707
      %v1732 = vadd.f32 %v1590, %v1709
      %v1733 = vadd.f32 %v1591, %v1711
      %v1734 = vadd.f32 %v1592, %v1713
      %v1735 = vadd.f32 %v1593, %v1715
      %v1736 = vadd.f32 %v1594, %v1717
      %v1737 = vadd.f32 %v1595, %v1719
      %v1739 = vlaneseq
      %v1740 = vshrl.u32 %v1739, 7
      %v1741 = vsub.s32 0, %v1740
      %v1742 = vrot.slane %v1374, %v1741
      %1743 = vrot.lane.b32.xlu0 %v1742, 64
      %v1744 = vpop.permute.xlu0 %1743
      %v1746 = vadd.f32 %v1729, %v1744
      %v1747 = vadd.f32 %v1730, %v1744
      %v1748 = vadd.f32 %v1731, %v1744
      %v1749 = vadd.f32 %v1732, %v1744
      %v1750 = vadd.f32 %v1733, %v1744
      %v1751 = vadd.f32 %v1734, %v1744
      %v1752 = vadd.f32 %v1735, %v1744
      %v1753 = vadd.f32 %v1736, %v1744
      %v1754 = vadd.f32 %v1737, %v1744
      %vm1755 = vcmp.gt.f32.partialorder %v1746, 0.0
      %vm1756 = vcmp.gt.f32.partialorder %v1747, 0.0
      %vm1757 = vcmp.gt.f32.partialorder %v1748, 0.0
      %vm1758 = vcmp.gt.f32.partialorder %v1749, 0.0
      %vm1759 = vcmp.gt.f32.partialorder %v1750, 0.0
      %vm1760 = vcmp.gt.f32.partialorder %v1751, 0.0
      %vm1761 = vcmp.gt.f32.partialorder %v1752, 0.0
      %vm1762 = vcmp.gt.f32.partialorder %v1753, 0.0
      %vm1763 = vcmp.gt.f32.partialorder %v1754, 0.0
      %v1764 = vmul.f32 %v1746, 0.2
      %v1765 = vmul.f32 %v1747, 0.2
      %v1766 = vmul.f32 %v1748, 0.2
      %v1767 = vmul.f32 %v1749, 0.2
      %v1768 = vmul.f32 %v1750, 0.2
      %v1769 = vmul.f32 %v1751, 0.2
      %v1770 = vmul.f32 %v1752, 0.2
      %v1771 = vmul.f32 %v1753, 0.2
      %v1772 = vmul.f32 %v1754, 0.2
      %v1773 = vsel %vm1755, %v1746, %v1764
      %v1774 = vsel %vm1756, %v1747, %v1765
      %v1775 = vsel %vm1757, %v1748, %v1766
      %v1776 = vsel %vm1758, %v1749, %v1767
      %v1777 = vsel %vm1759, %v1750, %v1768
      %v1778 = vsel %vm1760, %v1751, %v1769
      %v1779 = vsel %vm1761, %v1752, %v1770
      %v1780 = vsel %vm1762, %v1753, %v1771
      %v1781 = vsel %vm1763, %v1754, %v1772
      %1791 = vrot.lane.b32.xlu0 %v1773, 64
      %v1792 = vpop.permute.xlu0 %1791
      %1793 = vrot.lane.b32.xlu0 %v1774, 64
      %v1794 = vpop.permute.xlu0 %1793
      %1795 = vrot.lane.b32.xlu0 %v1775, 64
      %v1796 = vpop.permute.xlu0 %1795
      %1797 = vrot.lane.b32.xlu0 %v1776, 64
      %v1798 = vpop.permute.xlu0 %1797
      %1799 = vrot.lane.b32.xlu0 %v1777, 64
      %v1800 = vpop.permute.xlu0 %1799
      %1801 = vrot.lane.b32.xlu0 %v1778, 64
      %v1802 = vpop.permute.xlu0 %1801
      %1803 = vrot.lane.b32.xlu0 %v1779, 64
      %v1804 = vpop.permute.xlu0 %1803
      %1805 = vrot.lane.b32.xlu0 %v1780, 64
      %v1806 = vpop.permute.xlu0 %1805
      %1807 = vrot.lane.b32.xlu0 %v1781, 64
      %v1808 = vpop.permute.xlu0 %1807
      %1818 = vst.msk [vmem:[#allocation5 - $0x1] sm:$0xfe] %vm1450, %v1792
      %1819 = vst.msk [vmem:[#allocation5 + $0x7] sm:$0xff] %vm1453, %v1794
      %1820 = vst.msk [vmem:[#allocation5 + $0xf] sm:$0xff] %vm1453, %v1796
      %1821 = vst.msk [vmem:[#allocation5 + $0x17] sm:$0xff] %vm1453, %v1798
      %1822 = vst.msk [vmem:[#allocation5 + $0x1f] sm:$0xff] %vm1453, %v1800
      %1823 = vst.msk [vmem:[#allocation5 + $0x27] sm:$0xff] %vm1453, %v1802
      %1824 = vst.msk [vmem:[#allocation5 + $0x2f] sm:$0xff] %vm1453, %v1804
      %1825 = vst.msk [vmem:[#allocation5 + $0x37] sm:$0xff] %vm1453, %v1806
      %1826 = vst.msk [vmem:[#allocation5 + $0x3f] sm:$0x1] %vm1468, %v1808
      %v1827 = vld [vmem:[#allocation5] ss:$2 sm:$0xff]
      %s1828 = scalar_lea.vmem [#allocation5], 16
      %v1829 = vld [vmem:[%s1828] ss:$2 sm:$0xff]
      %s1830 = scalar_lea.vmem [#allocation5], 32
      %v1831 = vld [vmem:[%s1830] ss:$2 sm:$0xff]
      %s1832 = scalar_lea.vmem [#allocation5], 48
      %v1833 = vld [vmem:[%s1832] ss:$2 sm:$0xff]
      %s1834 = scalar_lea.vmem [#allocation5], 1
      %v1835 = vld [vmem:[%s1834] ss:$2 sm:$0xff]
      %s1836 = scalar_lea.vmem [#allocation5], 17
      %v1837 = vld [vmem:[%s1836] ss:$2 sm:$0xff]
      %s1838 = scalar_lea.vmem [#allocation5], 33
      %v1839 = vld [vmem:[%s1838] ss:$2 sm:$0xff]
      %s1840 = scalar_lea.vmem [#allocation5], 49
      %v1841 = vld [vmem:[%s1840] ss:$2 sm:$0xff]
      %v1842 = vmax.f32 %v1827, %v1835
      %v1843 = vmax.f32 %v1829, %v1837
      %v1844 = vmax.f32 %v1831, %v1839
      %v1845 = vmax.f32 %v1833, %v1841
      %v1846 = vld [vmem:[%s9] sm:$0xff]
      %v1847 = vld [vmem:[%s9 + $0x8] sm:$0xff]
      %v1848 = vld [vmem:[%s9 + $0x10] sm:$0xff]
      %v1849 = vld [vmem:[%s9 + $0x18] sm:$0xff]
      %v1850 = vmul.f32 %v1842, %v1846
      %v1851 = vmul.f32 %v1843, %v1847
      %v1852 = vmul.f32 %v1844, %v1848
      %v1853 = vmul.f32 %v1845, %v1849
      %v1854 = vld [vmem:[%s10] sm:$0xff]
      %v1856 = vsel %vm1189, %v1854, 0
      %1858 = vmatprep.subr.mxu0 0.0
      %1859 = vmatpush1.msra.mxu0 0.0
      %1860 = vmatprep.subr.mxu0 0.0
      %1861 = vmatpush1.msra.mxu0 0.0
      %1862 = vmatprep.subr.mxu0 0.0
      %1863 = vmatpush1.msra.mxu0 0.0
      %1864 = vmatprep.subr.mxu0 0.0
      %1865 = vmatpush1.msra.mxu0 0.0
      %1866 = vmatprep.subr.mxu0 0.0
      %1867 = vmatpush1.msra.mxu0 0.0
      %1868 = vmatprep.subr.mxu0 0.0
      %1869 = vmatpush1.msra.mxu0 0.0
      %1870 = vmatprep.subr.mxu0 0.0
      %1871 = vmatpush1.msra.mxu0 0.0
      %1872 = vmatprep.subr.mxu0 0.0
      %1873 = vmatpush1.msra.mxu0 0.0
      %1874 = vmatprep.subr.mxu0 0.0
      %1875 = vmatpush1.msra.mxu0 0.0
      %1876 = vmatprep.subr.mxu0 0.0
      %1877 = vmatpush1.msra.mxu0 0.0
      %1878 = vmatprep.subr.mxu0 0.0
      %1879 = vmatpush1.msra.mxu0 0.0
      %1880 = vmatprep.subr.mxu0 0.0
      %1881 = vmatpush1.msra.mxu0 0.0
      %1882 = vmatprep.subr.mxu0 0.0
      %1883 = vmatpush1.msra.mxu0 %v1853
      %1884 = vmatprep.subr.mxu0 0.0
      %1885 = vmatpush1.msra.mxu0 %v1852
      %1886 = vmatprep.subr.mxu0 0.0
      %1887 = vmatpush1.msra.mxu0 %v1851
      %1888 = vmatprep.subr.mxu0 0.0
      %1889 = vmatpush1.msra.mxu0 %v1850
      %1890 = vmatprep.subr.mxu0 0.0
      %1891 = vmatpush2.msra.mxu0 0.0
      %1892 = vmatprep.subr.mxu0 0.0
      %1893 = vmatpush2.msra.mxu0 0.0
      %1894 = vmatprep.subr.mxu0 0.0
      %1895 = vmatpush2.msra.mxu0 0.0
      %1896 = vmatprep.subr.mxu0 0.0
      %1897 = vmatpush2.msra.mxu0 0.0
      %1898 = vmatprep.subr.mxu0 0.0
      %1899 = vmatpush2.msra.mxu0 0.0
      %1900 = vmatprep.subr.mxu0 0.0
      %1901 = vmatpush2.msra.mxu0 0.0
      %1902 = vmatprep.subr.mxu0 0.0
      %1903 = vmatpush2.msra.mxu0 0.0
      %1904 = vmatprep.subr.mxu0 0.0
      %1905 = vmatpush2.msra.mxu0 0.0
      %1906 = vmatprep.subr.mxu0 0.0
      %1907 = vmatpush2.msra.mxu0 0.0
      %1908 = vmatprep.subr.mxu0 0.0
      %1909 = vmatpush2.msra.mxu0 0.0
      %1910 = vmatprep.subr.mxu0 0.0
      %1911 = vmatpush2.msra.mxu0 0.0
      %1912 = vmatprep.subr.mxu0 0.0
      %1913 = vmatpush2.msra.mxu0 0.0
      %1914 = vmatprep.subr.mxu0 0.0
      %1915 = vmatpush2.msra.mxu0 0.0
      %1916 = vmatprep.subr.mxu0 0.0
      %1917 = vmatpush2.msra.mxu0 0.0
      %1918 = vmatprep.subr.mxu0 0.0
      %1919 = vmatpush2.msra.mxu0 0.0
      %1920 = vmatprep.subr.mxu0 0.0
      %1921 = vmatpush2.msra.mxu0 0.0
      %1922 = vmatprep.mubr.f32.mxu0 0.0
      %1923 = vmatmul.mubr.f32.gmra.mxu0 %v1856
      %v1924 = vpop.f32.mrf.mxu0
      %v1925 = vadd.f32 0.0, %v1924
      %v1926 = vpop.f32.mrf.mxu0
      %1927 = vdwg.mxu0
      %v1928 = vsel %vm1453, %v1925, 0.0
      %1929 = vadd.xlane.f32.xlu0 %v1928
      %v1930 = vpop.xlane.xlu0 %1929
      %v1931 = vld [vmem:[#allocation6] sm:$0x1]
      %v1933 = vlaneseq
      %v1934 = vshrl.u32 %v1933, 7
      %v1935 = vsub.s32 0, %v1934
      %v1936 = vrot.slane %v1931, %v1935
      %v1938 = vadd.f32 %v1930, %v1936
      %v1939 = vsub.f32 0.0, %v1938
      %v1940 = vmul.f32 %v1939, 1.442695
      %v1941 = vpow.pop %v1940
      %v1942 = vadd.f32 %v1941, 1.0
      %v1943 = vrcp.pop %v1942
      %v1944 = vmul.f32 1.0, %v1943
      %vm1945 = vcmask 7168
      %1946 = vst.msk [vmem:[%s415] sm:$0xff] %vm1945, %v1944
      %p1947 = scmp.lt.s32.totalorder %s25, 1
      %s1948 = scalar_select %p1947, %s25, 1
      %s1949 = smul.addr %s1948, 8
      %s1950 = scalar_lea.vmem %s12, %s1949
      // Predicated region
      $region69: #{tpu_custom_call.1} parent=67 // pred_check
        %p1951 = pneg %p300
      $region70: #{tpu_custom_call.1} parent=67 // pred_check_branch
        %1953 = sbr.rel (%p1951) target = $region72
      $region71: #{tpu_custom_call.1} parent=67 // pred_region
        _
      $region72: #{tpu_custom_call.1} parent=67 // pred_fallthru
        _
    $region68: #{tpu_custom_call.1} parent=5 // pred_fallthru
      _
    %p1954 = scmp.le.s32.totalorder 2, %s20
    // Predicated region
    $region73: #{tpu_custom_call.1} parent=5 // pred_check
      %p1955 = pneg %p1954
    $region74: #{tpu_custom_call.1} parent=5 // pred_check_branch
      %1957 = sbr.rel (%p1955) target = $region76
    $region75: #{tpu_custom_call.1} parent=5 // pred_region
      %s1958 = ssub.s32 %s20, 2
      // Predicated region
      $region77: #{tpu_custom_call.1} parent=75 // pred_check
        %p1959 = pneg %p306
      $region78: #{tpu_custom_call.1} parent=75 // pred_check_branch
        %1961 = sbr.rel (%p1959) target = $region80
      $region79: #{tpu_custom_call.1} parent=75 // pred_region
        %p1962 = scmp.lt.s32.totalorder %s26, 1
        %s1963 = scalar_select %p1962, %s26, 1
        %s1964 = smul.addr %s1963, 8
        %s1965 = scalar_lea.vmem %s12, %s1964
      $region80: #{tpu_custom_call.1} parent=75 // pred_fallthru
        _
    $region76: #{tpu_custom_call.1} parent=5 // pred_fallthru
      _
  $region6: #{tpu_custom_call.1} parent=0 // loop_footer
    %s24 = sadd.s32 1, %s20
  $region7: #{tpu_custom_call.1} parent=0 // loop_footer_branch
    %19 = sbr.rel target = $region3
  $region8: #{tpu_custom_call.1} parent=0 // loop_exit
    _

</llo_original>
